<compile_context>
chip_gen: v6e
topology: v6e:2x2x1
jax: 0.10.0
libtpu: 0.0.40
codegen_flags: <defaults>
</compile_context>

<pallas_src>
import functools

import jax
import jax.numpy as jnp
from jax import lax
from jax.experimental import pallas as pl
from jax.experimental.pallas import tpu as pltpu


# ----------------------------- Pallas kernel --------------------------------
def _stylegan_block_kernel(x_ref, noise_ref, style_ref, cw_ref, cp_ref, o_ref,
                           *, S, K, PADL):
    # x_ref    : (NB, Cin, PADW)   zero-padded, row-major flattened activation;
    #                              pixel (y, x) lives at lane PADL + y*S + x.
    # noise_ref: (NB, 1, HW)       per-sample forward noise (torch.randn).
    # style_ref: (NB, Cout, 2)     [:, :, 0] = AdaIN scale, [:, :, 1] = shift
    #                              (precomputed in the wrapper with one GEMM).
    # cw_ref   : (K*K, Cout, Cin)  conv weight, tap-major (t = dy*K + dx).
    # cp_ref   : (Cout, 2)         [:, 0] = conv bias, [:, 1] = noise weight.
    # o_ref    : (NB, Cout, HW)
    NB, Cout, HW = o_ref.shape
    PADW = x_ref.shape[2]
    half = K // 2

    # Column (x) coordinate of every flattened output lane (S is a power of 2).
    col = lax.broadcasted_iota(jnp.int32, (1, HW), 1) & (S - 1)

    cp = cp_ref[...]
    cb = cp[:, 0:1]                     # (Cout, 1) conv bias
    nw = cp[:, 1:2]                     # (Cout, 1) InjectNoise weight

    for b in range(NB):                 # static unroll over samples in group
        xb = x_ref[b]                   # (Cin, PADW)

        # --- Conv2d(K=3, padding=1): 9 accumulating (Cout,Cin)x(Cin,HW)
        #     matmuls over lane-shifted views (im2col fused in-kernel).
        #     y-edges fall into the zero padding; x-edge wraparound across
        #     rows is removed with a per-dx column mask applied post-matmul.
        acc = jnp.zeros((Cout, HW), jnp.float32)
        for dx in range(K):
            part = jnp.zeros((Cout, HW), jnp.float32)
            for dy in range(K):
                off = (dy - half) * S + (dx - half)
                win = pltpu.roll(xb, PADW - (PADL + off), axis=1)[:, :HW]
                part = part + jnp.dot(cw_ref[dy * K + dx], win,
                                      preferred_element_type=jnp.float32)
            if dx < half:
                part = jnp.where(col >= (half - dx), part, 0.0)
            elif dx > half:
                part = jnp.where(col < S - (dx - half), part, 0.0)
            acc = acc + part

        # --- bias + InjectNoise + LeakyReLU(0.2) ---
        y = acc + cb + nw * noise_ref[b]
        y = jnp.where(y > 0, y, 0.2 * y)

        # --- InstanceNorm2d (biased var, eps=1e-5); d hoisted and reused ---
        mean = jnp.mean(y, axis=1, keepdims=True)
        d = y - mean
        var = jnp.mean(d * d, axis=1, keepdims=True)
        yn = d * lax.rsqrt(var + 1e-5)

        # --- AdaIN affine with precomputed per-sample scale / shift ---
        sty = style_ref[b]              # (Cout, 2)
        o_ref[b] = (sty[:, 0:1] * yn + sty[:, 1:2]).astype(o_ref.dtype)


# ------------------------------ JAX wrapper ----------------------------------
def micro_stylegan_generator_block(x, w, noise, params, *,
                                   starting_size, kernel_size=3,
                                   use_upsample=True):
    """x: (N, Cin, H, W) NCHW.  w: (N, w_dim).  noise: (N, 1, S, S)."""
    conv_w = params["conv_w"]      # (Cout, Cin, K, K)
    conv_b = params["conv_b"]      # (Cout,)
    noise_w = params["noise_w"]    # (Cout,)
    scale_w = params["scale_w"]    # (Cout, w_dim)
    scale_b = params["scale_b"]    # (Cout,)
    shift_w = params["shift_w"]    # (Cout, w_dim)
    shift_b = params["shift_b"]    # (Cout,)

    N, Cin = x.shape[0], x.shape[1]
    Cout = conv_w.shape[0]
    K = kernel_size
    S = starting_size
    HW = S * S

    assert K == 3, "kernel written for 3x3 / padding=1 convolutions"
    assert S & (S - 1) == 0, "spatial size must be a power of two"

    # nn.Upsample((S, S), mode='bilinear') (align_corners=False) -> half-pixel
    # bilinear; jax.image.resize uses the same mapping for upsampling.
    # TODO(synk): bilinear resize stays as XLA glue (no clean Pallas gather).
    if use_upsample:
        x = jax.image.resize(x, (N, Cin, S, S), method="bilinear")
    x = x.astype(jnp.float32)

    # --- AdaIN affine: one GEMM for all N samples, outside the kernel ---
    aff_w = jnp.concatenate([scale_w, shift_w], axis=0).astype(jnp.float32)
    aff_b = jnp.concatenate([scale_b, shift_b], axis=0).astype(jnp.float32)
    style = w.astype(jnp.float32) @ aff_w.T + aff_b                  # (N, 2*Cout)
    style = style.reshape(N, 2, Cout).transpose(0, 2, 1)             # (N, Cout, 2)

    # --- flatten + zero-pad activation (replaces the 9x im2col expansion) ---
    halo = (K // 2) * (S + 1)                       # max |lane shift| of a tap
    PADL = ((halo + 127) // 128) * 128              # lane-tile aligned pad
    PADW = 2 * PADL + HW
    x_pad = jnp.pad(x.reshape(N, Cin, HW), ((0, 0), (0, 0), (PADL, PADL)))

    noise_flat = noise.reshape(N, 1, HW).astype(jnp.float32)

    # conv weight tap-major + packed per-channel column params
    cw = jnp.transpose(conv_w, (2, 3, 0, 1)).reshape(K * K, Cout, Cin)
    cw = cw.astype(jnp.float32)
    cp = jnp.stack([conv_b, noise_w], axis=1).astype(jnp.float32)    # (Cout, 2)

    # Grid: 2 "parallel" batch groups when possible (both v7x TensorCores),
    # remaining batch folded into each step (fewer serial steps on v5e/v6e).
    G = 2 if (N >= 2 and N % 2 == 0) else 1
    NB = N // G
    assert NB * G == N

    kernel = functools.partial(_stylegan_block_kernel, S=S, K=K, PADL=PADL)

    out_flat = pl.pallas_call(
        kernel,
        out_shape=jax.ShapeDtypeStruct((N, Cout, HW), jnp.float32),
        grid_spec=pltpu.PrefetchScalarGridSpec(
            num_scalar_prefetch=0,
            grid=(G,),
            in_specs=[
                pl.BlockSpec((NB, Cin, PADW), lambda g: (g, 0, 0)),     # activation
                pl.BlockSpec((NB, 1, HW), lambda g: (g, 0, 0)),         # noise
                pl.BlockSpec((NB, Cout, 2), lambda g: (g, 0, 0)),       # AdaIN affine
                pl.BlockSpec((K * K, Cout, Cin), lambda g: (0, 0, 0)),  # conv weight
                pl.BlockSpec((Cout, 2), lambda g: (0, 0)),              # bias/noise w
            ],
            out_specs=pl.BlockSpec((NB, Cout, HW), lambda g: (g, 0, 0)),
        ),
        compiler_params=pltpu.CompilerParams(
            dimension_semantics=("parallel",)),
    )(x_pad, noise_flat, style, cw, cp)

    return out_flat.reshape(N, Cout, S, S)


# --------------------------- pure-JAX reference ------------------------------
def _reference(x, w, noise, params, *, starting_size, kernel_size=3,
               use_upsample=True):
    N, Cin = x.shape[0], x.shape[1]
    S = starting_size
    if use_upsample:
        x = jax.image.resize(x, (N, Cin, S, S), method="bilinear")
    y = lax.conv_general_dilated(
        x, params["conv_w"], window_strides=(1, 1), padding=((1, 1), (1, 1)),
        dimension_numbers=("NCHW", "OIHW", "NCHW"))
    y = y + params["conv_b"][None, :, None, None]
    y = y + params["noise_w"][None, :, None, None] * noise
    y = jnp.where(y > 0, y, 0.2 * y)
    mean = jnp.mean(y, axis=(2, 3), keepdims=True)
    var = jnp.mean((y - mean) ** 2, axis=(2, 3), keepdims=True)
    yn = (y - mean) / jnp.sqrt(var + 1e-5)
    scale = (w @ params["scale_w"].T + params["scale_b"])[:, :, None, None]
    shift = (w @ params["shift_w"].T + params["shift_b"])[:, :, None, None]
    return scale * yn + shift


# ---------------------------------- main -------------------------------------
if __name__ == "__main__":
    N, in_chan, out_chan = 2, 4, 8
    w_dim, kernel_size, starting_size = 32, 3, 16
    H0 = W0 = 8  # pre-upsample spatial size

    key = jax.random.PRNGKey(0)
    keys = jax.random.split(key, 12)

    x = jax.random.normal(keys[0], (N, in_chan, H0, W0), jnp.float32)
    w = jax.random.normal(keys[1], (N, w_dim), jnp.float32)
    # Forward-time noise of InjectNoise (torch.randn of shape (N,1,S,S)),
    # generated deterministically here and passed in.
    noise = jax.random.normal(keys[2], (N, 1, starting_size, starting_size),
                              jnp.float32)

    fan_in = in_chan * kernel_size * kernel_size
    params = {
        "conv_w": jax.random.normal(keys[3], (out_chan, in_chan, kernel_size,
                                              kernel_size), jnp.float32)
                  * (1.0 / jnp.sqrt(fan_in)),
        "conv_b": jax.random.normal(keys[4], (out_chan,), jnp.float32) * 0.1,
        "noise_w": jax.random.normal(keys[5], (out_chan,), jnp.float32),
        "scale_w": jax.random.normal(keys[6], (out_chan, w_dim), jnp.float32)
                   * (1.0 / jnp.sqrt(w_dim)),
        "scale_b": jax.random.normal(keys[7], (out_chan,), jnp.float32) * 0.1,
        "shift_w": jax.random.normal(keys[8], (out_chan, w_dim), jnp.float32)
                   * (1.0 / jnp.sqrt(w_dim)),
        "shift_b": jax.random.normal(keys[9], (out_chan,), jnp.float32) * 0.1,
    }

    out = micro_stylegan_generator_block(
        x, w, noise, params, starting_size=starting_size,
        kernel_size=kernel_size, use_upsample=True)
    out = jax.block_until_ready(out)

    ref = jax.block_until_ready(_reference(
        x, w, noise, params, starting_size=starting_size,
        kernel_size=kernel_size, use_upsample=True))

    assert out.shape == (N, out_chan, starting_size, starting_size), out.shape
    assert jnp.allclose(out, ref, atol=1e-4, rtol=1e-4), (
        float(jnp.max(jnp.abs(out - ref))))

    print("KERNEL_OK")
</pallas_src>

<mosaic_0001>
module attributes {stable_mosaic.version = 11 : i64} {
  func.func @_stylegan_block_kernel(%arg0: i32, %arg1: memref<1x4x512xf32, #tpu.memory_space<vmem>>, %arg2: memref<1x1x256xf32, #tpu.memory_space<vmem>>, %arg3: memref<1x8x2xf32, #tpu.memory_space<vmem>>, %arg4: memref<9x8x4xf32, #tpu.memory_space<vmem>>, %arg5: memref<8x2xf32, #tpu.memory_space<vmem>>, %arg6: memref<1x8x256xf32, #tpu.memory_space<vmem>>) attributes {dimension_semantics = [#tpu.dimension_semantics<parallel>], iteration_bounds = array<i64: 2>, scalar_prefetch = 0 : i64, scratch_operands = 0 : i64, tpu.core_type = #tpu.core_type<tc>, window_params = [{transform_indices = @transform_0, window_bounds = array<i64: 1, 4, 512>}, {transform_indices = @transform_1, window_bounds = array<i64: 1, 1, 256>}, {transform_indices = @transform_2, window_bounds = array<i64: 1, 8, 2>}, {pipeline_mode = #tpu.pipeline_mode<synchronous>, transform_indices = @transform_3, window_bounds = array<i64: 9, 8, 4>}, {pipeline_mode = #tpu.pipeline_mode<synchronous>, transform_indices = @transform_4, window_bounds = array<i64: 8, 2>}, {transform_indices = @transform_5, window_bounds = array<i64: 1, 8, 256>}]} {
    %0 = tpu.iota {dimensions = array<i32: 1>} : vector<1x256xi32>
    %c15_i32 = arith.constant 15 : i32
    %1 = vector.broadcast %c15_i32 : i32 to vector<1x256xi32>
    %2 = arith.andi %0, %1 : vector<1x256xi32>
    %c0 = arith.constant 0 : index
    %c0_0 = arith.constant 0 : index
    %3 = vector.load %arg5[%c0, %c0_0] : memref<8x2xf32, #tpu.memory_space<vmem>>, vector<8x2xf32>
    %4 = vector.extract_strided_slice %3 {offsets = [0, 0], sizes = [8, 1], strides = [1, 1]} : vector<8x2xf32> to vector<8x1xf32>
    %5 = vector.extract_strided_slice %3 {offsets = [0, 1], sizes = [8, 1], strides = [1, 1]} : vector<8x2xf32> to vector<8x1xf32>
    %c0_1 = arith.constant 0 : index
    %c0_2 = arith.constant 0 : index
    %c0_3 = arith.constant 0 : index
    %6 = vector.load %arg1[%c0_1, %c0_2, %c0_3] : memref<1x4x512xf32, #tpu.memory_space<vmem>>, vector<1x4x512xf32>
    %7 = vector.shape_cast %6 : vector<1x4x512xf32> to vector<4x512xf32>
    %cst = arith.constant 0.000000e+00 : f32
    %8 = vector.broadcast %cst : f32 to vector<8x256xf32>
    %cst_4 = arith.constant 0.000000e+00 : f32
    %9 = vector.broadcast %cst_4 : f32 to vector<8x256xf32>
    %c401_i32 = arith.constant 401 : i32
    %10 = tpu.dynamic_rotate %7 by %c401_i32 dim 1 : vector<4x512xf32>, i32 -> vector<4x512xf32>
    %11 = vector.extract_strided_slice %10 {offsets = [0, 0], sizes = [4, 256], strides = [1, 1]} : vector<4x512xf32> to vector<4x256xf32>
    %c0_5 = arith.constant 0 : index
    %c0_6 = arith.constant 0 : index
    %c0_7 = arith.constant 0 : index
    %12 = vector.load %arg4[%c0_5, %c0_6, %c0_7] : memref<9x8x4xf32, #tpu.memory_space<vmem>>, vector<1x8x4xf32>
    %13 = vector.shape_cast %12 : vector<1x8x4xf32> to vector<8x4xf32>
    %cst_8 = arith.constant dense<0.000000e+00> : vector<8x256xf32>
    %14 = tpu.matmul %13, %11, %cst_8 {dimension_numbers = #tpu.dot_dimension_numbers<[1], [0], [0], [1], [0, 0, 1, 1], [], []>} : vector<8x4xf32>, vector<4x256xf32>, vector<8x256xf32> -> vector<8x256xf32>
    %15 = arith.addf %9, %14 : vector<8x256xf32>
    %c385_i32 = arith.constant 385 : i32
    %16 = tpu.dynamic_rotate %7 by %c385_i32 dim 1 : vector<4x512xf32>, i32 -> vector<4x512xf32>
    %17 = vector.extract_strided_slice %16 {offsets = [0, 0], sizes = [4, 256], strides = [1, 1]} : vector<4x512xf32> to vector<4x256xf32>
    %c3 = arith.constant 3 : index
    %c0_9 = arith.constant 0 : index
    %c0_10 = arith.constant 0 : index
    %18 = vector.load %arg4[%c3, %c0_9, %c0_10] : memref<9x8x4xf32, #tpu.memory_space<vmem>>, vector<1x8x4xf32>
    %19 = vector.shape_cast %18 : vector<1x8x4xf32> to vector<8x4xf32>
    %cst_11 = arith.constant dense<0.000000e+00> : vector<8x256xf32>
    %20 = tpu.matmul %19, %17, %cst_11 {dimension_numbers = #tpu.dot_dimension_numbers<[1], [0], [0], [1], [0, 0, 1, 1], [], []>} : vector<8x4xf32>, vector<4x256xf32>, vector<8x256xf32> -> vector<8x256xf32>
    %21 = arith.addf %15, %20 : vector<8x256xf32>
    %c369_i32 = arith.constant 369 : i32
    %22 = tpu.dynamic_rotate %7 by %c369_i32 dim 1 : vector<4x512xf32>, i32 -> vector<4x512xf32>
    %23 = vector.extract_strided_slice %22 {offsets = [0, 0], sizes = [4, 256], strides = [1, 1]} : vector<4x512xf32> to vector<4x256xf32>
    %c6 = arith.constant 6 : index
    %c0_12 = arith.constant 0 : index
    %c0_13 = arith.constant 0 : index
    %24 = vector.load %arg4[%c6, %c0_12, %c0_13] : memref<9x8x4xf32, #tpu.memory_space<vmem>>, vector<1x8x4xf32>
    %25 = vector.shape_cast %24 : vector<1x8x4xf32> to vector<8x4xf32>
    %cst_14 = arith.constant dense<0.000000e+00> : vector<8x256xf32>
    %26 = tpu.matmul %25, %23, %cst_14 {dimension_numbers = #tpu.dot_dimension_numbers<[1], [0], [0], [1], [0, 0, 1, 1], [], []>} : vector<8x4xf32>, vector<4x256xf32>, vector<8x256xf32> -> vector<8x256xf32>
    %27 = arith.addf %21, %26 : vector<8x256xf32>
    %c1_i32 = arith.constant 1 : i32
    %28 = vector.broadcast %c1_i32 : i32 to vector<1x256xi32>
    %29 = arith.cmpi sge, %2, %28 : vector<1x256xi32>
    %cst_15 = arith.constant 0.000000e+00 : f32
    %30 = vector.shape_cast %29 : vector<1x256xi1> to vector<1x256xi1>
    %31 = vector.broadcast %30 : vector<1x256xi1> to vector<8x256xi1>
    %32 = vector.broadcast %cst_15 : f32 to vector<8x256xf32>
    %33 = arith.select %31, %27, %32 : vector<8x256xi1>, vector<8x256xf32>
    %34 = arith.addf %8, %33 : vector<8x256xf32>
    %cst_16 = arith.constant 0.000000e+00 : f32
    %35 = vector.broadcast %cst_16 : f32 to vector<8x256xf32>
    %c400_i32 = arith.constant 400 : i32
    %36 = tpu.dynamic_rotate %7 by %c400_i32 dim 1 : vector<4x512xf32>, i32 -> vector<4x512xf32>
    %37 = vector.extract_strided_slice %36 {offsets = [0, 0], sizes = [4, 256], strides = [1, 1]} : vector<4x512xf32> to vector<4x256xf32>
    %c1 = arith.constant 1 : index
    %c0_17 = arith.constant 0 : index
    %c0_18 = arith.constant 0 : index
    %38 = vector.load %arg4[%c1, %c0_17, %c0_18] : memref<9x8x4xf32, #tpu.memory_space<vmem>>, vector<1x8x4xf32>
    %39 = vector.shape_cast %38 : vector<1x8x4xf32> to vector<8x4xf32>
    %cst_19 = arith.constant dense<0.000000e+00> : vector<8x256xf32>
    %40 = tpu.matmul %39, %37, %cst_19 {dimension_numbers = #tpu.dot_dimension_numbers<[1], [0], [0], [1], [0, 0, 1, 1], [], []>} : vector<8x4xf32>, vector<4x256xf32>, vector<8x256xf32> -> vector<8x256xf32>
    %41 = arith.addf %35, %40 : vector<8x256xf32>
    %c384_i32 = arith.constant 384 : i32
    %42 = tpu.dynamic_rotate %7 by %c384_i32 dim 1 : vector<4x512xf32>, i32 -> vector<4x512xf32>
    %43 = vector.extract_strided_slice %42 {offsets = [0, 0], sizes = [4, 256], strides = [1, 1]} : vector<4x512xf32> to vector<4x256xf32>
    %c4 = arith.constant 4 : index
    %c0_20 = arith.constant 0 : index
    %c0_21 = arith.constant 0 : index
    %44 = vector.load %arg4[%c4, %c0_20, %c0_21] : memref<9x8x4xf32, #tpu.memory_space<vmem>>, vector<1x8x4xf32>
    %45 = vector.shape_cast %44 : vector<1x8x4xf32> to vector<8x4xf32>
    %cst_22 = arith.constant dense<0.000000e+00> : vector<8x256xf32>
    %46 = tpu.matmul %45, %43, %cst_22 {dimension_numbers = #tpu.dot_dimension_numbers<[1], [0], [0], [1], [0, 0, 1, 1], [], []>} : vector<8x4xf32>, vector<4x256xf32>, vector<8x256xf32> -> vector<8x256xf32>
    %47 = arith.addf %41, %46 : vector<8x256xf32>
    %c368_i32 = arith.constant 368 : i32
    %48 = tpu.dynamic_rotate %7 by %c368_i32 dim 1 : vector<4x512xf32>, i32 -> vector<4x512xf32>
    %49 = vector.extract_strided_slice %48 {offsets = [0, 0], sizes = [4, 256], strides = [1, 1]} : vector<4x512xf32> to vector<4x256xf32>
    %c7 = arith.constant 7 : index
    %c0_23 = arith.constant 0 : index
    %c0_24 = arith.constant 0 : index
    %50 = vector.load %arg4[%c7, %c0_23, %c0_24] : memref<9x8x4xf32, #tpu.memory_space<vmem>>, vector<1x8x4xf32>
    %51 = vector.shape_cast %50 : vector<1x8x4xf32> to vector<8x4xf32>
    %cst_25 = arith.constant dense<0.000000e+00> : vector<8x256xf32>
    %52 = tpu.matmul %51, %49, %cst_25 {dimension_numbers = #tpu.dot_dimension_numbers<[1], [0], [0], [1], [0, 0, 1, 1], [], []>} : vector<8x4xf32>, vector<4x256xf32>, vector<8x256xf32> -> vector<8x256xf32>
    %53 = arith.addf %47, %52 : vector<8x256xf32>
    %54 = arith.addf %34, %53 : vector<8x256xf32>
    %cst_26 = arith.constant 0.000000e+00 : f32
    %55 = vector.broadcast %cst_26 : f32 to vector<8x256xf32>
    %c399_i32 = arith.constant 399 : i32
    %56 = tpu.dynamic_rotate %7 by %c399_i32 dim 1 : vector<4x512xf32>, i32 -> vector<4x512xf32>
    %57 = vector.extract_strided_slice %56 {offsets = [0, 0], sizes = [4, 256], strides = [1, 1]} : vector<4x512xf32> to vector<4x256xf32>
    %c2 = arith.constant 2 : index
    %c0_27 = arith.constant 0 : index
    %c0_28 = arith.constant 0 : index
    %58 = vector.load %arg4[%c2, %c0_27, %c0_28] : memref<9x8x4xf32, #tpu.memory_space<vmem>>, vector<1x8x4xf32>
    %59 = vector.shape_cast %58 : vector<1x8x4xf32> to vector<8x4xf32>
    %cst_29 = arith.constant dense<0.000000e+00> : vector<8x256xf32>
    %60 = tpu.matmul %59, %57, %cst_29 {dimension_numbers = #tpu.dot_dimension_numbers<[1], [0], [0], [1], [0, 0, 1, 1], [], []>} : vector<8x4xf32>, vector<4x256xf32>, vector<8x256xf32> -> vector<8x256xf32>
    %61 = arith.addf %55, %60 : vector<8x256xf32>
    %c383_i32 = arith.constant 383 : i32
    %62 = tpu.dynamic_rotate %7 by %c383_i32 dim 1 : vector<4x512xf32>, i32 -> vector<4x512xf32>
    %63 = vector.extract_strided_slice %62 {offsets = [0, 0], sizes = [4, 256], strides = [1, 1]} : vector<4x512xf32> to vector<4x256xf32>
    %c5 = arith.constant 5 : index
    %c0_30 = arith.constant 0 : index
    %c0_31 = arith.constant 0 : index
    %64 = vector.load %arg4[%c5, %c0_30, %c0_31] : memref<9x8x4xf32, #tpu.memory_space<vmem>>, vector<1x8x4xf32>
    %65 = vector.shape_cast %64 : vector<1x8x4xf32> to vector<8x4xf32>
    %cst_32 = arith.constant dense<0.000000e+00> : vector<8x256xf32>
    %66 = tpu.matmul %65, %63, %cst_32 {dimension_numbers = #tpu.dot_dimension_numbers<[1], [0], [0], [1], [0, 0, 1, 1], [], []>} : vector<8x4xf32>, vector<4x256xf32>, vector<8x256xf32> -> vector<8x256xf32>
    %67 = arith.addf %61, %66 : vector<8x256xf32>
    %c367_i32 = arith.constant 367 : i32
    %68 = tpu.dynamic_rotate %7 by %c367_i32 dim 1 : vector<4x512xf32>, i32 -> vector<4x512xf32>
    %69 = vector.extract_strided_slice %68 {offsets = [0, 0], sizes = [4, 256], strides = [1, 1]} : vector<4x512xf32> to vector<4x256xf32>
    %c8 = arith.constant 8 : index
    %c0_33 = arith.constant 0 : index
    %c0_34 = arith.constant 0 : index
    %70 = vector.load %arg4[%c8, %c0_33, %c0_34] : memref<9x8x4xf32, #tpu.memory_space<vmem>>, vector<1x8x4xf32>
    %71 = vector.shape_cast %70 : vector<1x8x4xf32> to vector<8x4xf32>
    %cst_35 = arith.constant dense<0.000000e+00> : vector<8x256xf32>
    %72 = tpu.matmul %71, %69, %cst_35 {dimension_numbers = #tpu.dot_dimension_numbers<[1], [0], [0], [1], [0, 0, 1, 1], [], []>} : vector<8x4xf32>, vector<4x256xf32>, vector<8x256xf32> -> vector<8x256xf32>
    %73 = arith.addf %67, %72 : vector<8x256xf32>
    %c15_i32_36 = arith.constant 15 : i32
    %74 = vector.broadcast %c15_i32_36 : i32 to vector<1x256xi32>
    %75 = arith.cmpi slt, %2, %74 : vector<1x256xi32>
    %cst_37 = arith.constant 0.000000e+00 : f32
    %76 = vector.shape_cast %75 : vector<1x256xi1> to vector<1x256xi1>
    %77 = vector.broadcast %76 : vector<1x256xi1> to vector<8x256xi1>
    %78 = vector.broadcast %cst_37 : f32 to vector<8x256xf32>
    %79 = arith.select %77, %73, %78 : vector<8x256xi1>, vector<8x256xf32>
    %80 = arith.addf %54, %79 : vector<8x256xf32>
    %81 = vector.broadcast %4 : vector<8x1xf32> to vector<8x256xf32>
    %82 = arith.addf %80, %81 : vector<8x256xf32>
    %c0_38 = arith.constant 0 : index
    %c0_39 = arith.constant 0 : index
    %c0_40 = arith.constant 0 : index
    %83 = vector.load %arg2[%c0_38, %c0_39, %c0_40] : memref<1x1x256xf32, #tpu.memory_space<vmem>>, vector<1x1x256xf32>
    %84 = vector.shape_cast %83 : vector<1x1x256xf32> to vector<1x256xf32>
    %85 = vector.broadcast %5 : vector<8x1xf32> to vector<8x256xf32>
    %86 = vector.broadcast %84 : vector<1x256xf32> to vector<8x256xf32>
    %87 = arith.mulf %85, %86 : vector<8x256xf32>
    %88 = arith.addf %82, %87 : vector<8x256xf32>
    %cst_41 = arith.constant 0.000000e+00 : f32
    %89 = vector.broadcast %cst_41 : f32 to vector<8x256xf32>
    %90 = arith.cmpf ogt, %88, %89 : vector<8x256xf32>
    %cst_42 = arith.constant 2.000000e-01 : f32
    %91 = vector.broadcast %cst_42 : f32 to vector<8x256xf32>
    %92 = arith.mulf %91, %88 : vector<8x256xf32>
    %93 = arith.select %90, %88, %92 : vector<8x256xi1>, vector<8x256xf32>
    %cst_43 = arith.constant dense<0.000000e+00> : vector<8xf32>
    %94 = vector.multi_reduction <add>, %93, %cst_43 [1] : vector<8x256xf32> to vector<8xf32>
    %95 = vector.shape_cast %94 : vector<8xf32> to vector<8x1xf32>
    %cst_44 = arith.constant 2.560000e+02 : f32
    %96 = vector.broadcast %cst_44 : f32 to vector<8x1xf32>
    %97 = arith.divf %95, %96 : vector<8x1xf32>
    %98 = vector.broadcast %97 : vector<8x1xf32> to vector<8x256xf32>
    %99 = arith.subf %93, %98 : vector<8x256xf32>
    %100 = arith.mulf %99, %99 : vector<8x256xf32>
    %cst_45 = arith.constant dense<0.000000e+00> : vector<8xf32>
    %101 = vector.multi_reduction <add>, %100, %cst_45 [1] : vector<8x256xf32> to vector<8xf32>
    %102 = vector.shape_cast %101 : vector<8xf32> to vector<8x1xf32>
    %cst_46 = arith.constant 2.560000e+02 : f32
    %103 = vector.broadcast %cst_46 : f32 to vector<8x1xf32>
    %104 = arith.divf %102, %103 : vector<8x1xf32>
    %cst_47 = arith.constant 9.99999974E-6 : f32
    %105 = vector.broadcast %cst_47 : f32 to vector<8x1xf32>
    %106 = arith.addf %104, %105 : vector<8x1xf32>
    %107 = math.rsqrt %106 : vector<8x1xf32>
    %108 = vector.broadcast %107 : vector<8x1xf32> to vector<8x256xf32>
    %109 = arith.mulf %99, %108 : vector<8x256xf32>
    %c0_48 = arith.constant 0 : index
    %c0_49 = arith.constant 0 : index
    %c0_50 = arith.constant 0 : index
    %110 = vector.load %arg3[%c0_48, %c0_49, %c0_50] : memref<1x8x2xf32, #tpu.memory_space<vmem>>, vector<1x8x2xf32>
    %111 = vector.shape_cast %110 : vector<1x8x2xf32> to vector<8x2xf32>
    %112 = vector.extract_strided_slice %111 {offsets = [0, 0], sizes = [8, 1], strides = [1, 1]} : vector<8x2xf32> to vector<8x1xf32>
    %113 = vector.broadcast %112 : vector<8x1xf32> to vector<8x256xf32>
    %114 = arith.mulf %113, %109 : vector<8x256xf32>
    %115 = vector.extract_strided_slice %111 {offsets = [0, 1], sizes = [8, 1], strides = [1, 1]} : vector<8x2xf32> to vector<8x1xf32>
    %116 = vector.broadcast %115 : vector<8x1xf32> to vector<8x256xf32>
    %117 = arith.addf %114, %116 : vector<8x256xf32>
    %c0_51 = arith.constant 0 : index
    %c0_52 = arith.constant 0 : index
    %c0_53 = arith.constant 0 : index
    %118 = vector.load %arg6[%c0_51, %c0_52, %c0_53] : memref<1x8x256xf32, #tpu.memory_space<vmem>>, vector<1x8x256xf32>
    %119 = vector.shape_cast %118 : vector<1x8x256xf32> to vector<8x256xf32>
    %120 = vector.shape_cast %117 : vector<8x256xf32> to vector<1x8x256xf32>
    tpu.vector_store %arg6[%c0_51, %c0_52, %c0_53], %120 {strides = array<i32>} : memref<1x8x256xf32, #tpu.memory_space<vmem>>, vector<1x8x256xf32>,
    return
  }
  func.func @transform_0(%arg0: i32) -> (i32, i32, i32) {
    %c0_i32 = arith.constant 0 : i32
    %c0_i32_0 = arith.constant 0 : i32
    %c0_i32_1 = arith.constant 0 : i32
    return %arg0, %c0_i32, %c0_i32_0 : i32, i32, i32
  }
  func.func @transform_1(%arg0: i32) -> (i32, i32, i32) {
    %c0_i32 = arith.constant 0 : i32
    %c0_i32_0 = arith.constant 0 : i32
    %c0_i32_1 = arith.constant 0 : i32
    return %arg0, %c0_i32, %c0_i32_0 : i32, i32, i32
  }
  func.func @transform_2(%arg0: i32) -> (i32, i32, i32) {
    %c0_i32 = arith.constant 0 : i32
    %c0_i32_0 = arith.constant 0 : i32
    %c0_i32_1 = arith.constant 0 : i32
    return %arg0, %c0_i32, %c0_i32_0 : i32, i32, i32
  }
  func.func @transform_3(%arg0: i32) -> (i32, i32, i32) {
    %c0_i32 = arith.constant 0 : i32
    %c0_i32_0 = arith.constant 0 : i32
    %c0_i32_1 = arith.constant 0 : i32
    %c0_i32_2 = arith.constant 0 : i32
    return %c0_i32, %c0_i32_0, %c0_i32_1 : i32, i32, i32
  }
  func.func @transform_4(%arg0: i32) -> (i32, i32) {
    %c0_i32 = arith.constant 0 : i32
    %c0_i32_0 = arith.constant 0 : i32
    %c0_i32_1 = arith.constant 0 : i32
    return %c0_i32, %c0_i32_0 : i32, i32
  }
  func.func @transform_5(%arg0: i32) -> (i32, i32, i32) {
    %c0_i32 = arith.constant 0 : i32
    %c0_i32_0 = arith.constant 0 : i32
    %c0_i32_1 = arith.constant 0 : i32
    return %arg0, %c0_i32, %c0_i32_0 : i32, i32, i32
  }
}

</mosaic_0001>

<llo_original>
// kernel: tpu_custom_call.1
$region0: #{tpu_custom_call.1}
  #allocation0 [shape = 'u32[]', space=smem, size = 0x4, offset = 0x4, fixed_abs, tag = 'smem constant byte address 0x4 - core index']
  #allocation1 [shape = 'u32[144,128]{1,0:T(1,128)}', space=vmem, size = 0x12000, scoped, tag = 'internal scratch']
  %s0 = inlined_call_operand.vmem [shape: f32[2,4,512], index: 0, kind: input, shape index: {}]
  %s1 = inlined_call_operand.vmem [shape: f32[2,1,256], index: 1, kind: input, shape index: {}]
  %s2 = inlined_call_operand.vmem [shape: f32[2,8,2], index: 2, kind: input, shape index: {}]
  %s3 = inlined_call_operand.vmem [shape: f32[9,8,4], index: 3, kind: input, shape index: {}]
  %s4 = inlined_call_operand.vmem [shape: f32[8,2], index: 4, kind: input, shape index: {}]
  %s5 = inlined_call_operand.hbm [shape: f32[2,8,256], index: 5, kind: output, shape index: {}]
  %s6 = sld [smem:[#allocation0]]
  $region53: #{tpu_custom_call.1} parent=0
    _
  %s8 = ssub.s32 1, %s6
  %s9 = scalar_select 0, %s8, %s6
  $region1: #{tpu_custom_call.1} parent=0
    #allocation2 [shape = 'u8[16384]{0}', space=vmem, size = 0x4000, scoped, tag = 'output window, operand 0']
    #allocation3 [shape = 's32[2]{0}', space=sflag, size = 0x8, scoped, tag = 'scoped memory for tpu_custom_call.1']
    %10 = vsyncpa [#allocation3], 0
    %s11 = scalar_lea.sflag [#allocation3], 1
    %12 = vsyncpa %s11, 0
    loop: start=0, step=1, limit=4
    $region2: #{tpu_custom_call.1} parent=1 // loop_pre_header
      _
    $region3: #{tpu_custom_call.1} parent=1 // loop_header
      %s14 = sphi 0, %s18
      %p15 = scmp.ge.s32.totalorder %s14, 4
      %s24 = sphi 0, %s26
      %s27 = sphi 0, %s24
      %s28 = sphi 0, %s27
      %s44 = sphi 0, %s28
      %s50 = sphi 0, %s52
      %s53 = sphi 0, %s50
      %s54 = sphi 0, %s53
      %s70 = sphi 0, %s54
      %s76 = sphi 0, %s78
      %s79 = sphi 0, %s76
      %s80 = sphi 0, %s79
      %s96 = sphi 0, %s80
      %s100 = sphi 0, %s100
      %s102 = sphi 0, %s100
      %s103 = sphi 0, %s102
      %s117 = sphi 0, %s103
      %s121 = sphi 0, %s121
      %s123 = sphi 0, %s121
      %s124 = sphi 0, %s123
      %s138 = sphi 0, %s124
      %s144 = sphi 0, %s146
      %s147 = sphi 0, %s144
      %s148 = sphi 0, %s147
      %s164 = sphi 0, %s148
    $region4: #{tpu_custom_call.1} parent=1 // loop_header_branch
      %17 = sbr.rel (%p15) target = $region8
    $region5: #{tpu_custom_call.1} parent=1 // loop_body
      %s19 = ssub.s32 %s14, 1
      %s20 = ssub.s32 %s14, 2
      %s21 = sadd.s32 %s14, 1
      %s22 = ssub.s32 %s14, %s21
      %p23 = scmp.eq.s32.totalorder %s22, 0
      %s25 = sadd.s32 %s24, 1
      %s26 = scalar_select %p23, %s24, %s25
      %p29 = pneg %p23
      %p30 = scmp.eq.s32.totalorder %s14, 1
      %p31 = por %p29, %p30
      %p32 = scmp.ne.s32.totalorder %s24, %s27
      %p33 = scmp.eq.s32.totalorder %s14, 0
      %p34 = por %p32, %p33
      %p35 = scmp.ne.s32.totalorder %s24, %s27
      %p36 = scmp.eq.s32.totalorder %s19, 1
      %p37 = por %p35, %p36
      %p38 = scmp.ne.s32.totalorder %s27, %s28
      %p39 = scmp.eq.s32.totalorder %s19, 0
      %p40 = por %p38, %p39
      %p41 = scmp.ne.s32.totalorder %s27, %s28
      %p42 = scmp.eq.s32.totalorder %s20, 1
      %p43 = por %p41, %p42
      %p45 = scmp.ne.s32.totalorder %s28, %s44
      %p46 = scmp.eq.s32.totalorder %s20, 0
      %p47 = por %p45, %p46
      %s48 = ssub.s32 %s14, %s21
      %p49 = scmp.eq.s32.totalorder %s48, 0
      %s51 = sadd.s32 %s50, 1
      %s52 = scalar_select %p49, %s50, %s51
      %p55 = pneg %p49
      %p56 = scmp.eq.s32.totalorder %s14, 1
      %p57 = por %p55, %p56
      %p58 = scmp.ne.s32.totalorder %s50, %s53
      %p59 = scmp.eq.s32.totalorder %s14, 0
      %p60 = por %p58, %p59
      %p61 = scmp.ne.s32.totalorder %s50, %s53
      %p62 = scmp.eq.s32.totalorder %s19, 1
      %p63 = por %p61, %p62
      %p64 = scmp.ne.s32.totalorder %s53, %s54
      %p65 = scmp.eq.s32.totalorder %s19, 0
      %p66 = por %p64, %p65
      %p67 = scmp.ne.s32.totalorder %s53, %s54
      %p68 = scmp.eq.s32.totalorder %s20, 1
      %p69 = por %p67, %p68
      %p71 = scmp.ne.s32.totalorder %s54, %s70
      %p72 = scmp.eq.s32.totalorder %s20, 0
      %p73 = por %p71, %p72
      %s74 = ssub.s32 %s14, %s21
      %p75 = scmp.eq.s32.totalorder %s74, 0
      %s77 = sadd.s32 %s76, 1
      %s78 = scalar_select %p75, %s76, %s77
      %p81 = pneg %p75
      %p82 = scmp.eq.s32.totalorder %s14, 1
      %p83 = por %p81, %p82
      %p84 = scmp.ne.s32.totalorder %s76, %s79
      %p85 = scmp.eq.s32.totalorder %s14, 0
      %p86 = por %p84, %p85
      %p87 = scmp.ne.s32.totalorder %s76, %s79
      %p88 = scmp.eq.s32.totalorder %s19, 1
      %p89 = por %p87, %p88
      %p90 = scmp.ne.s32.totalorder %s79, %s80
      %p91 = scmp.eq.s32.totalorder %s19, 0
      %p92 = por %p90, %p91
      %p93 = scmp.ne.s32.totalorder %s79, %s80
      %p94 = scmp.eq.s32.totalorder %s20, 1
      %p95 = por %p93, %p94
      %p97 = scmp.ne.s32.totalorder %s80, %s96
      %p98 = scmp.eq.s32.totalorder %s20, 0
      %p99 = por %p97, %p98
      %s101 = sadd.s32 %s100, 1
      %p104 = scmp.eq.s32.totalorder %s14, 1
      %p105 = scmp.ne.s32.totalorder %s100, %s102
      %p106 = scmp.eq.s32.totalorder %s14, 0
      %p107 = por %p105, %p106
      %p108 = scmp.ne.s32.totalorder %s100, %s102
      %p109 = scmp.eq.s32.totalorder %s19, 1
      %p110 = por %p108, %p109
      %p111 = scmp.ne.s32.totalorder %s102, %s103
      %p112 = scmp.eq.s32.totalorder %s19, 0
      %p113 = por %p111, %p112
      %p114 = scmp.ne.s32.totalorder %s102, %s103
      %p115 = scmp.eq.s32.totalorder %s20, 1
      %p116 = por %p114, %p115
      %p118 = scmp.ne.s32.totalorder %s103, %s117
      %p119 = scmp.eq.s32.totalorder %s20, 0
      %p120 = por %p118, %p119
      %s122 = sadd.s32 %s121, 1
      %p125 = scmp.eq.s32.totalorder %s14, 1
      %p126 = scmp.ne.s32.totalorder %s121, %s123
      %p127 = scmp.eq.s32.totalorder %s14, 0
      %p128 = por %p126, %p127
      %p129 = scmp.ne.s32.totalorder %s121, %s123
      %p130 = scmp.eq.s32.totalorder %s19, 1
      %p131 = por %p129, %p130
      %p132 = scmp.ne.s32.totalorder %s123, %s124
      %p133 = scmp.eq.s32.totalorder %s19, 0
      %p134 = por %p132, %p133
      %p135 = scmp.ne.s32.totalorder %s123, %s124
      %p136 = scmp.eq.s32.totalorder %s20, 1
      %p137 = por %p135, %p136
      %p139 = scmp.ne.s32.totalorder %s124, %s138
      %p140 = scmp.eq.s32.totalorder %s20, 0
      %p141 = por %p139, %p140
      %s142 = ssub.s32 %s14, %s21
      %p143 = scmp.eq.s32.totalorder %s142, 0
      %s145 = sadd.s32 %s144, 1
      %s146 = scalar_select %p143, %s144, %s145
      %p149 = pneg %p143
      %p150 = scmp.eq.s32.totalorder %s14, 1
      %p151 = por %p149, %p150
      %p152 = scmp.ne.s32.totalorder %s144, %s147
      %p153 = scmp.eq.s32.totalorder %s14, 0
      %p154 = por %p152, %p153
      %p155 = scmp.ne.s32.totalorder %s144, %s147
      %p156 = scmp.eq.s32.totalorder %s19, 1
      %p157 = por %p155, %p156
      %p158 = scmp.ne.s32.totalorder %s147, %s148
      %p159 = scmp.eq.s32.totalorder %s19, 0
      %p160 = por %p158, %p159
      %p161 = scmp.ne.s32.totalorder %s147, %s148
      %p162 = scmp.eq.s32.totalorder %s20, 1
      %p163 = por %p161, %p162
      %p165 = scmp.ne.s32.totalorder %s148, %s164
      %p166 = scmp.eq.s32.totalorder %s20, 0
      %p167 = por %p165, %p166
      %p168 = scmp.le.s32.totalorder 1, %s14
      %p169 = scmp.lt.s32.totalorder %s14, 3
      %p170 = pnand %p168, %p169
      %p171 = pneg %p170
      // Predicated region
      $region9: #{tpu_custom_call.1} parent=5 // pred_check
        _
      $region10: #{tpu_custom_call.1} parent=5 // pred_check_branch
        %173 = sbr.rel (%p170) target = $region12
      $region11: #{tpu_custom_call.1} parent=5 // pred_region
        %s174 = ssub.s32 %s14, 1
        // Predicated region
        $region13: #{tpu_custom_call.1} parent=11 // pred_check
          %p175 = pneg %p113
        $region14: #{tpu_custom_call.1} parent=11 // pred_check_branch
          %177 = sbr.rel (%p175) target = $region16
        $region15: #{tpu_custom_call.1} parent=11 // pred_region
          _
        $region16: #{tpu_custom_call.1} parent=11 // pred_fallthru
          _
        // Predicated region
        $region17: #{tpu_custom_call.1} parent=11 // pred_check
          %p178 = pneg %p134
        $region18: #{tpu_custom_call.1} parent=11 // pred_check_branch
          %180 = sbr.rel (%p178) target = $region20
        $region19: #{tpu_custom_call.1} parent=11 // pred_region
          _
        $region20: #{tpu_custom_call.1} parent=11 // pred_fallthru
          _
      $region12: #{tpu_custom_call.1} parent=5 // pred_fallthru
        _
      %p181 = scmp.lt.s32.totalorder %s14, 2
      // Predicated region
      $region21: #{tpu_custom_call.1} parent=5 // pred_check
        %p182 = pneg %p181
      $region22: #{tpu_custom_call.1} parent=5 // pred_check_branch
        %184 = sbr.rel (%p182) target = $region24
      $region23: #{tpu_custom_call.1} parent=5 // pred_region
        // Predicated region
        $region25: #{tpu_custom_call.1} parent=23 // pred_check
          %p185 = pneg %p34
        $region26: #{tpu_custom_call.1} parent=23 // pred_check_branch
          %187 = sbr.rel (%p185) target = $region28
        $region27: #{tpu_custom_call.1} parent=23 // pred_region
          %p188 = scmp.lt.s32.totalorder %s14, 1
          %s189 = scalar_select %p188, %s14, 1
          %s190 = smul.addr %s189, 4
          %s191 = smul.addr %s190, 4
          %s192 = scalar_lea.vmem %s0, %s191
        $region28: #{tpu_custom_call.1} parent=23 // pred_fallthru
          _
        // Predicated region
        $region29: #{tpu_custom_call.1} parent=23 // pred_check
          %p193 = pneg %p60
        $region30: #{tpu_custom_call.1} parent=23 // pred_check_branch
          %195 = sbr.rel (%p193) target = $region32
        $region31: #{tpu_custom_call.1} parent=23 // pred_region
          %p196 = scmp.lt.s32.totalorder %s14, 1
          %s197 = scalar_select %p196, %s14, 1
          %s198 = smul.addr %s197, 2
          %s199 = scalar_lea.vmem %s1, %s198
        $region32: #{tpu_custom_call.1} parent=23 // pred_fallthru
          _
        // Predicated region
        $region33: #{tpu_custom_call.1} parent=23 // pred_check
          %p200 = pneg %p86
        $region34: #{tpu_custom_call.1} parent=23 // pred_check_branch
          %202 = sbr.rel (%p200) target = $region36
        $region35: #{tpu_custom_call.1} parent=23 // pred_region
          %p203 = scmp.lt.s32.totalorder %s14, 1
          %s204 = scalar_select %p203, %s14, 1
          %s205 = smul.addr %s204, 8
          %s206 = scalar_lea.vmem %s2, %s205
        $region36: #{tpu_custom_call.1} parent=23 // pred_fallthru
          _
      $region24: #{tpu_custom_call.1} parent=5 // pred_fallthru
        _
      %p207 = scmp.le.s32.totalorder 1, %s14
      %p208 = scmp.lt.s32.totalorder %s14, 3
      %p209 = pnand %p207, %p208
      %p210 = pneg %p209
      // Predicated region
      $region37: #{tpu_custom_call.1} parent=5 // pred_check
        _
      $region38: #{tpu_custom_call.1} parent=5 // pred_check_branch
        %212 = sbr.rel (%p209) target = $region40
      $region39: #{tpu_custom_call.1} parent=5 // pred_region
        %s213 = ssub.s32 %s14, 1
        %p214 = scmp.lt.s32.totalorder %s19, 1
        %s215 = scalar_select %p214, %s19, 1
        %s216 = smul.addr %s215, 4
        %s217 = smul.addr %s216, 4
        %s218 = scalar_lea.vmem %s0, %s217
        %p219 = pneg %p40
        %p220 = pneg %p37
        %p221 = scmp.lt.s32.totalorder %s19, 1
        %s222 = scalar_select %p221, %s19, 1
        %s223 = smul.addr %s222, 2
        %s224 = scalar_lea.vmem %s1, %s223
        %p225 = pneg %p66
        %p226 = pneg %p63
        %p227 = scmp.lt.s32.totalorder %s19, 1
        %s228 = scalar_select %p227, %s19, 1
        %s229 = smul.addr %s228, 8
        %s230 = scalar_lea.vmem %s2, %s229
        %p231 = pneg %p92
        %p232 = pneg %p89
        %p233 = pneg %p113
        %p234 = pneg %p110
        %p235 = pneg %p134
        %p236 = pneg %p131
        %p237 = pneg %p160
        %p238 = pneg %p157
        %s239 = sand.u32 %s147, 1
        %s240 = scalar_lea.sflag [#allocation3], %s239
        %s241 = sand.u32 %s147, 1
        %s242 = smul.addr %s241, 16
        %s243 = scalar_lea.vmem [#allocation2], %s242
        %p244 = scmp.lt.s32.totalorder %s19, 1
        %s245 = scalar_select %p244, %s19, 1
        %s246 = smul.addr %s245, 4
        %s247 = smul.addr %s246, 4
        %s248 = scalar_lea.vmem %s0, %s247
        %p249 = scmp.lt.s32.totalorder %s19, 1
        %s250 = scalar_select %p249, %s19, 1
        %s251 = smul.addr %s250, 2
        %s252 = scalar_lea.vmem %s1, %s251
        %p253 = scmp.lt.s32.totalorder %s19, 1
        %s254 = scalar_select %p253, %s19, 1
        %s255 = smul.addr %s254, 8
        %s256 = scalar_lea.vmem %s2, %s255
        %v257 = vlaneseq
        %v258 = vand.u32 %v257, 127
        %v259 = vadd.s32 %v258, 128
        %v260 = vand.u32 %v258, 15
        %v261 = vand.u32 %v259, 15
        %v262 = vld [vmem:[%s4] sm:$0xff]
        %v263 = vld [vmem:[%s248] sm:$0xff]
        %v264 = vld [vmem:[%s248 + $0x8] sm:$0xff]
        %v267 = vcombine.high %v263, %v263
        %269 = vrot.lane.b32.xlu0 %v263, 17
        %v270 = vpop.permute.xlu0 %269
        %271 = vrot.lane.b32.xlu0 %v267, 17
        %v272 = vpop.permute.xlu0 %271
        %273 = vrot.lane.b32.xlu0 %v264, 17
        %v274 = vpop.permute.xlu0 %273
        %vm275 = vcmp.lt.s32.totalorder %v258, 17
        %v276 = vsel %vm275, %v272, %v274
        %v277 = vsel %vm275, %v270, %v272
        %v278 = vld [vmem:[%s3] sm:$0xff]
        %279 = vrot.lane.b32.xlu0 %v263, 1
        %v280 = vpop.permute.xlu0 %279
        %281 = vrot.lane.b32.xlu0 %v267, 1
        %v282 = vpop.permute.xlu0 %281
        %283 = vrot.lane.b32.xlu0 %v264, 1
        %v284 = vpop.permute.xlu0 %283
        %vm285 = vcmp.lt.s32.totalorder %v258, 1
        %v286 = vsel %vm285, %v282, %v284
        %v287 = vsel %vm285, %v280, %v282
        %s288 = scalar_lea.vmem %s3, 24
        %v289 = vld [vmem:[%s288] sm:$0xff]
        %vm290 = vcmask 31744
        %v292 = vsel %vm290, %v289, 0
        %vm294 = vcmask 1043456
        %v296 = vsel %vm294, %v287, 0
        %v299 = vsel %vm294, %v286, 0
        %301 = vmatprep.subr.mxu0 0.0
        %302 = vmatpush1.msra.mxu0 0.0
        %303 = vmatprep.subr.mxu0 0.0
        %304 = vmatpush1.msra.mxu0 0.0
        %305 = vmatprep.subr.mxu0 0.0
        %306 = vmatpush1.msra.mxu0 0.0
        %307 = vmatprep.subr.mxu0 0.0
        %308 = vmatpush1.msra.mxu0 0.0
        %309 = vmatprep.subr.mxu0 0.0
        %310 = vmatpush1.msra.mxu0 0.0
        %311 = vmatprep.subr.mxu0 0.0
        %312 = vmatpush1.msra.mxu0 0.0
        %313 = vmatprep.subr.mxu0 0.0
        %314 = vmatpush1.msra.mxu0 0.0
        %315 = vmatprep.subr.mxu0 0.0
        %316 = vmatpush1.msra.mxu0 0.0
        %317 = vmatprep.subr.mxu0 0.0
        %318 = vmatpush1.msra.mxu0 0.0
        %319 = vmatprep.subr.mxu0 0.0
        %320 = vmatpush1.msra.mxu0 0.0
        %321 = vmatprep.subr.mxu0 0.0
        %322 = vmatpush1.msra.mxu0 0.0
        %323 = vmatprep.subr.mxu0 0.0
        %324 = vmatpush1.msra.mxu0 0.0
        %325 = vmatprep.subr.mxu0 0.0
        %326 = vmatpush1.msra.mxu0 0.0
        %327 = vmatprep.subr.mxu0 0.0
        %328 = vmatpush1.msra.mxu0 0.0
        %329 = vmatprep.subr.mxu0 0.0
        %330 = vmatpush1.msra.mxu0 0.0
        %331 = vmatprep.subr.mxu0 %v299
        %332 = vmatpush1.msra.mxu0 %v296
        %333 = vmatprep.subr.mxu0 0.0
        %334 = vmatpush2.msra.mxu0 0.0
        %335 = vmatprep.subr.mxu0 0.0
        %336 = vmatpush2.msra.mxu0 0.0
        %337 = vmatprep.subr.mxu0 0.0
        %338 = vmatpush2.msra.mxu0 0.0
        %339 = vmatprep.subr.mxu0 0.0
        %340 = vmatpush2.msra.mxu0 0.0
        %341 = vmatprep.subr.mxu0 0.0
        %342 = vmatpush2.msra.mxu0 0.0
        %343 = vmatprep.subr.mxu0 0.0
        %344 = vmatpush2.msra.mxu0 0.0
        %345 = vmatprep.subr.mxu0 0.0
        %346 = vmatpush2.msra.mxu0 0.0
        %347 = vmatprep.subr.mxu0 0.0
        %348 = vmatpush2.msra.mxu0 0.0
        %349 = vmatprep.subr.mxu0 0.0
        %350 = vmatpush2.msra.mxu0 0.0
        %351 = vmatprep.subr.mxu0 0.0
        %352 = vmatpush2.msra.mxu0 0.0
        %353 = vmatprep.subr.mxu0 0.0
        %354 = vmatpush2.msra.mxu0 0.0
        %355 = vmatprep.subr.mxu0 0.0
        %356 = vmatpush2.msra.mxu0 0.0
        %357 = vmatprep.subr.mxu0 0.0
        %358 = vmatpush2.msra.mxu0 0.0
        %359 = vmatprep.subr.mxu0 0.0
        %360 = vmatpush2.msra.mxu0 0.0
        %361 = vmatprep.subr.mxu0 0.0
        %362 = vmatpush2.msra.mxu0 0.0
        %363 = vmatprep.subr.mxu0 0.0
        %364 = vmatpush2.msra.mxu0 0.0
        %365 = vmatprep.mubr.f32.mxu0 0.0
        %366 = vmatmul.mubr.f32.gmra.mxu0 %v292
        %v367 = vpop.f32.mrf.mxu0
        %v368 = vadd.f32 0.0, %v367
        %v369 = vpop.f32.mrf.mxu0
        %v370 = vadd.f32 0.0, %v369
        %371 = vdwg.mxu0
        %v373 = vsel %vm290, %v278, 0
        %v376 = vsel %vm294, %v277, 0
        %v379 = vsel %vm294, %v276, 0
        %381 = vmatprep.subr.mxu0 0.0
        %382 = vmatpush1.msra.mxu0 0.0
        %383 = vmatprep.subr.mxu0 0.0
        %384 = vmatpush1.msra.mxu0 0.0
        %385 = vmatprep.subr.mxu0 0.0
        %386 = vmatpush1.msra.mxu0 0.0
        %387 = vmatprep.subr.mxu0 0.0
        %388 = vmatpush1.msra.mxu0 0.0
        %389 = vmatprep.subr.mxu0 0.0
        %390 = vmatpush1.msra.mxu0 0.0
        %391 = vmatprep.subr.mxu0 0.0
        %392 = vmatpush1.msra.mxu0 0.0
        %393 = vmatprep.subr.mxu0 0.0
        %394 = vmatpush1.msra.mxu0 0.0
        %395 = vmatprep.subr.mxu0 0.0
        %396 = vmatpush1.msra.mxu0 0.0
        %397 = vmatprep.subr.mxu0 0.0
        %398 = vmatpush1.msra.mxu0 0.0
        %399 = vmatprep.subr.mxu0 0.0
        %400 = vmatpush1.msra.mxu0 0.0
        %401 = vmatprep.subr.mxu0 0.0
        %402 = vmatpush1.msra.mxu0 0.0
        %403 = vmatprep.subr.mxu0 0.0
        %404 = vmatpush1.msra.mxu0 0.0
        %405 = vmatprep.subr.mxu0 0.0
        %406 = vmatpush1.msra.mxu0 0.0
        %407 = vmatprep.subr.mxu0 0.0
        %408 = vmatpush1.msra.mxu0 0.0
        %409 = vmatprep.subr.mxu0 0.0
        %410 = vmatpush1.msra.mxu0 0.0
        %411 = vmatprep.subr.mxu0 %v379
        %412 = vmatpush1.msra.mxu0 %v376
        %413 = vmatprep.subr.mxu0 0.0
        %414 = vmatpush2.msra.mxu0 0.0
        %415 = vmatprep.subr.mxu0 0.0
        %416 = vmatpush2.msra.mxu0 0.0
        %417 = vmatprep.subr.mxu0 0.0
        %418 = vmatpush2.msra.mxu0 0.0
        %419 = vmatprep.subr.mxu0 0.0
        %420 = vmatpush2.msra.mxu0 0.0
        %421 = vmatprep.subr.mxu0 0.0
        %422 = vmatpush2.msra.mxu0 0.0
        %423 = vmatprep.subr.mxu0 0.0
        %424 = vmatpush2.msra.mxu0 0.0
        %425 = vmatprep.subr.mxu0 0.0
        %426 = vmatpush2.msra.mxu0 0.0
        %427 = vmatprep.subr.mxu0 0.0
        %428 = vmatpush2.msra.mxu0 0.0
        %429 = vmatprep.subr.mxu0 0.0
        %430 = vmatpush2.msra.mxu0 0.0
        %431 = vmatprep.subr.mxu0 0.0
        %432 = vmatpush2.msra.mxu0 0.0
        %433 = vmatprep.subr.mxu0 0.0
        %434 = vmatpush2.msra.mxu0 0.0
        %435 = vmatprep.subr.mxu0 0.0
        %436 = vmatpush2.msra.mxu0 0.0
        %437 = vmatprep.subr.mxu0 0.0
        %438 = vmatpush2.msra.mxu0 0.0
        %439 = vmatprep.subr.mxu0 0.0
        %440 = vmatpush2.msra.mxu0 0.0
        %441 = vmatprep.subr.mxu0 0.0
        %442 = vmatpush2.msra.mxu0 0.0
        %443 = vmatprep.subr.mxu0 0.0
        %444 = vmatpush2.msra.mxu0 0.0
        %445 = vmatprep.mubr.f32.mxu0 0.0
        %446 = vmatmul.mubr.f32.gmra.mxu0 %v373
        %v447 = vpop.f32.mrf.mxu0
        %v448 = vadd.f32 %v368, %v447
        %v449 = vpop.f32.mrf.mxu0
        %v450 = vadd.f32 %v370, %v449
        %451 = vdwg.mxu0
        %v452 = vcombine.high %v264, %v264
        %454 = vrot.lane.b32.xlu0 %v267, 113
        %v455 = vpop.permute.xlu0 %454
        %456 = vrot.lane.b32.xlu0 %v264, 113
        %v457 = vpop.permute.xlu0 %456
        %458 = vrot.lane.b32.xlu0 %v452, 113
        %v459 = vpop.permute.xlu0 %458
        %vm460 = vcmp.lt.s32.totalorder %v258, 113
        %v461 = vsel %vm460, %v457, %v459
        %v462 = vsel %vm460, %v455, %v457
        %s463 = scalar_lea.vmem %s3, 48
        %v464 = vld [vmem:[%s463] sm:$0xff]
        %v466 = vsel %vm290, %v464, 0
        %v469 = vsel %vm294, %v462, 0
        %v472 = vsel %vm294, %v461, 0
        %474 = vmatprep.subr.mxu0 0.0
        %475 = vmatpush1.msra.mxu0 0.0
        %476 = vmatprep.subr.mxu0 0.0
        %477 = vmatpush1.msra.mxu0 0.0
        %478 = vmatprep.subr.mxu0 0.0
        %479 = vmatpush1.msra.mxu0 0.0
        %480 = vmatprep.subr.mxu0 0.0
        %481 = vmatpush1.msra.mxu0 0.0
        %482 = vmatprep.subr.mxu0 0.0
        %483 = vmatpush1.msra.mxu0 0.0
        %484 = vmatprep.subr.mxu0 0.0
        %485 = vmatpush1.msra.mxu0 0.0
        %486 = vmatprep.subr.mxu0 0.0
        %487 = vmatpush1.msra.mxu0 0.0
        %488 = vmatprep.subr.mxu0 0.0
        %489 = vmatpush1.msra.mxu0 0.0
        %490 = vmatprep.subr.mxu0 0.0
        %491 = vmatpush1.msra.mxu0 0.0
        %492 = vmatprep.subr.mxu0 0.0
        %493 = vmatpush1.msra.mxu0 0.0
        %494 = vmatprep.subr.mxu0 0.0
        %495 = vmatpush1.msra.mxu0 0.0
        %496 = vmatprep.subr.mxu0 0.0
        %497 = vmatpush1.msra.mxu0 0.0
        %498 = vmatprep.subr.mxu0 0.0
        %499 = vmatpush1.msra.mxu0 0.0
        %500 = vmatprep.subr.mxu0 0.0
        %501 = vmatpush1.msra.mxu0 0.0
        %502 = vmatprep.subr.mxu0 0.0
        %503 = vmatpush1.msra.mxu0 0.0
        %504 = vmatprep.subr.mxu0 %v472
        %505 = vmatpush1.msra.mxu0 %v469
        %506 = vmatprep.subr.mxu0 0.0
        %507 = vmatpush2.msra.mxu0 0.0
        %508 = vmatprep.subr.mxu0 0.0
        %509 = vmatpush2.msra.mxu0 0.0
        %510 = vmatprep.subr.mxu0 0.0
        %511 = vmatpush2.msra.mxu0 0.0
        %512 = vmatprep.subr.mxu0 0.0
        %513 = vmatpush2.msra.mxu0 0.0
        %514 = vmatprep.subr.mxu0 0.0
        %515 = vmatpush2.msra.mxu0 0.0
        %516 = vmatprep.subr.mxu0 0.0
        %517 = vmatpush2.msra.mxu0 0.0
        %518 = vmatprep.subr.mxu0 0.0
        %519 = vmatpush2.msra.mxu0 0.0
        %520 = vmatprep.subr.mxu0 0.0
        %521 = vmatpush2.msra.mxu0 0.0
        %522 = vmatprep.subr.mxu0 0.0
        %523 = vmatpush2.msra.mxu0 0.0
        %524 = vmatprep.subr.mxu0 0.0
        %525 = vmatpush2.msra.mxu0 0.0
        %526 = vmatprep.subr.mxu0 0.0
        %527 = vmatpush2.msra.mxu0 0.0
        %528 = vmatprep.subr.mxu0 0.0
        %529 = vmatpush2.msra.mxu0 0.0
        %530 = vmatprep.subr.mxu0 0.0
        %531 = vmatpush2.msra.mxu0 0.0
        %532 = vmatprep.subr.mxu0 0.0
        %533 = vmatpush2.msra.mxu0 0.0
        %534 = vmatprep.subr.mxu0 0.0
        %535 = vmatpush2.msra.mxu0 0.0
        %536 = vmatprep.subr.mxu0 0.0
        %537 = vmatpush2.msra.mxu0 0.0
        %538 = vmatprep.mubr.f32.mxu0 0.0
        %539 = vmatmul.mubr.f32.gmra.mxu0 %v466
        %v540 = vpop.f32.mrf.mxu0
        %v541 = vadd.f32 0.0, %v540
        %v542 = vpop.f32.mrf.mxu0
        %v543 = vadd.f32 0.0, %v542
        %544 = vdwg.mxu0
        %v545 = vadd.f32 %v448, %v541
        %v546 = vadd.f32 %v450, %v543
        %vm547 = vcmp.ge.s32.totalorder %v260, 1
        %vm548 = vcmp.ge.s32.totalorder %v261, 1
        %v549 = vsel %vm547, 1, 0
        %v550 = vsel %vm548, 1, 0
        %vm551 = vcmp.eq.s32.totalorder %v549, 1
        %vm552 = vcmp.eq.s32.totalorder %v550, 1
        %v553 = vsel %vm551, %v545, 0.0
        %v554 = vsel %vm552, %v546, 0.0
        %v555 = vadd.f32 %v553, 0.0
        %v556 = vadd.f32 %v554, 0.0
        %557 = vrot.lane.b32.xlu0 %v263, 16
        %v558 = vpop.permute.xlu0 %557
        %559 = vrot.lane.b32.xlu0 %v267, 16
        %v560 = vpop.permute.xlu0 %559
        %561 = vrot.lane.b32.xlu0 %v264, 16
        %v562 = vpop.permute.xlu0 %561
        %vm563 = vcmp.lt.s32.totalorder %v258, 16
        %v564 = vsel %vm563, %v560, %v562
        %v565 = vsel %vm563, %v558, %v560
        %s566 = scalar_lea.vmem %s3, 8
        %v567 = vld [vmem:[%s566] sm:$0xff]
        %s568 = scalar_lea.vmem %s3, 32
        %v569 = vld [vmem:[%s568] sm:$0xff]
        %v571 = vsel %vm290, %v569, 0
        %v573 = vsel %vm294, %v267, 0
        %v575 = vsel %vm294, %v264, 0
        %577 = vmatprep.subr.mxu0 0.0
        %578 = vmatpush1.msra.mxu0 0.0
        %579 = vmatprep.subr.mxu0 0.0
        %580 = vmatpush1.msra.mxu0 0.0
        %581 = vmatprep.subr.mxu0 0.0
        %582 = vmatpush1.msra.mxu0 0.0
        %583 = vmatprep.subr.mxu0 0.0
        %584 = vmatpush1.msra.mxu0 0.0
        %585 = vmatprep.subr.mxu0 0.0
        %586 = vmatpush1.msra.mxu0 0.0
        %587 = vmatprep.subr.mxu0 0.0
        %588 = vmatpush1.msra.mxu0 0.0
        %589 = vmatprep.subr.mxu0 0.0
        %590 = vmatpush1.msra.mxu0 0.0
        %591 = vmatprep.subr.mxu0 0.0
        %592 = vmatpush1.msra.mxu0 0.0
        %593 = vmatprep.subr.mxu0 0.0
        %594 = vmatpush1.msra.mxu0 0.0
        %595 = vmatprep.subr.mxu0 0.0
        %596 = vmatpush1.msra.mxu0 0.0
        %597 = vmatprep.subr.mxu0 0.0
        %598 = vmatpush1.msra.mxu0 0.0
        %599 = vmatprep.subr.mxu0 0.0
        %600 = vmatpush1.msra.mxu0 0.0
        %601 = vmatprep.subr.mxu0 0.0
        %602 = vmatpush1.msra.mxu0 0.0
        %603 = vmatprep.subr.mxu0 0.0
        %604 = vmatpush1.msra.mxu0 0.0
        %605 = vmatprep.subr.mxu0 0.0
        %606 = vmatpush1.msra.mxu0 0.0
        %607 = vmatprep.subr.mxu0 %v575
        %608 = vmatpush1.msra.mxu0 %v573
        %609 = vmatprep.subr.mxu0 0.0
        %610 = vmatpush2.msra.mxu0 0.0
        %611 = vmatprep.subr.mxu0 0.0
        %612 = vmatpush2.msra.mxu0 0.0
        %613 = vmatprep.subr.mxu0 0.0
        %614 = vmatpush2.msra.mxu0 0.0
        %615 = vmatprep.subr.mxu0 0.0
        %616 = vmatpush2.msra.mxu0 0.0
        %617 = vmatprep.subr.mxu0 0.0
        %618 = vmatpush2.msra.mxu0 0.0
        %619 = vmatprep.subr.mxu0 0.0
        %620 = vmatpush2.msra.mxu0 0.0
        %621 = vmatprep.subr.mxu0 0.0
        %622 = vmatpush2.msra.mxu0 0.0
        %623 = vmatprep.subr.mxu0 0.0
        %624 = vmatpush2.msra.mxu0 0.0
        %625 = vmatprep.subr.mxu0 0.0
        %626 = vmatpush2.msra.mxu0 0.0
        %627 = vmatprep.subr.mxu0 0.0
        %628 = vmatpush2.msra.mxu0 0.0
        %629 = vmatprep.subr.mxu0 0.0
        %630 = vmatpush2.msra.mxu0 0.0
        %631 = vmatprep.subr.mxu0 0.0
        %632 = vmatpush2.msra.mxu0 0.0
        %633 = vmatprep.subr.mxu0 0.0
        %634 = vmatpush2.msra.mxu0 0.0
        %635 = vmatprep.subr.mxu0 0.0
        %636 = vmatpush2.msra.mxu0 0.0
        %637 = vmatprep.subr.mxu0 0.0
        %638 = vmatpush2.msra.mxu0 0.0
        %639 = vmatprep.subr.mxu0 0.0
        %640 = vmatpush2.msra.mxu0 0.0
        %641 = vmatprep.mubr.f32.mxu0 0.0
        %642 = vmatmul.mubr.f32.gmra.mxu0 %v571
        %v643 = vpop.f32.mrf.mxu0
        %v644 = vadd.f32 0.0, %v643
        %v645 = vpop.f32.mrf.mxu0
        %v646 = vadd.f32 0.0, %v645
        %647 = vdwg.mxu0
        %v649 = vsel %vm290, %v567, 0
        %v652 = vsel %vm294, %v565, 0
        %v655 = vsel %vm294, %v564, 0
        %657 = vmatprep.subr.mxu0 0.0
        %658 = vmatpush1.msra.mxu0 0.0
        %659 = vmatprep.subr.mxu0 0.0
        %660 = vmatpush1.msra.mxu0 0.0
        %661 = vmatprep.subr.mxu0 0.0
        %662 = vmatpush1.msra.mxu0 0.0
        %663 = vmatprep.subr.mxu0 0.0
        %664 = vmatpush1.msra.mxu0 0.0
        %665 = vmatprep.subr.mxu0 0.0
        %666 = vmatpush1.msra.mxu0 0.0
        %667 = vmatprep.subr.mxu0 0.0
        %668 = vmatpush1.msra.mxu0 0.0
        %669 = vmatprep.subr.mxu0 0.0
        %670 = vmatpush1.msra.mxu0 0.0
        %671 = vmatprep.subr.mxu0 0.0
        %672 = vmatpush1.msra.mxu0 0.0
        %673 = vmatprep.subr.mxu0 0.0
        %674 = vmatpush1.msra.mxu0 0.0
        %675 = vmatprep.subr.mxu0 0.0
        %676 = vmatpush1.msra.mxu0 0.0
        %677 = vmatprep.subr.mxu0 0.0
        %678 = vmatpush1.msra.mxu0 0.0
        %679 = vmatprep.subr.mxu0 0.0
        %680 = vmatpush1.msra.mxu0 0.0
        %681 = vmatprep.subr.mxu0 0.0
        %682 = vmatpush1.msra.mxu0 0.0
        %683 = vmatprep.subr.mxu0 0.0
        %684 = vmatpush1.msra.mxu0 0.0
        %685 = vmatprep.subr.mxu0 0.0
        %686 = vmatpush1.msra.mxu0 0.0
        %687 = vmatprep.subr.mxu0 %v655
        %688 = vmatpush1.msra.mxu0 %v652
        %689 = vmatprep.subr.mxu0 0.0
        %690 = vmatpush2.msra.mxu0 0.0
        %691 = vmatprep.subr.mxu0 0.0
        %692 = vmatpush2.msra.mxu0 0.0
        %693 = vmatprep.subr.mxu0 0.0
        %694 = vmatpush2.msra.mxu0 0.0
        %695 = vmatprep.subr.mxu0 0.0
        %696 = vmatpush2.msra.mxu0 0.0
        %697 = vmatprep.subr.mxu0 0.0
        %698 = vmatpush2.msra.mxu0 0.0
        %699 = vmatprep.subr.mxu0 0.0
        %700 = vmatpush2.msra.mxu0 0.0
        %701 = vmatprep.subr.mxu0 0.0
        %702 = vmatpush2.msra.mxu0 0.0
        %703 = vmatprep.subr.mxu0 0.0
        %704 = vmatpush2.msra.mxu0 0.0
        %705 = vmatprep.subr.mxu0 0.0
        %706 = vmatpush2.msra.mxu0 0.0
        %707 = vmatprep.subr.mxu0 0.0
        %708 = vmatpush2.msra.mxu0 0.0
        %709 = vmatprep.subr.mxu0 0.0
        %710 = vmatpush2.msra.mxu0 0.0
        %711 = vmatprep.subr.mxu0 0.0
        %712 = vmatpush2.msra.mxu0 0.0
        %713 = vmatprep.subr.mxu0 0.0
        %714 = vmatpush2.msra.mxu0 0.0
        %715 = vmatprep.subr.mxu0 0.0
        %716 = vmatpush2.msra.mxu0 0.0
        %717 = vmatprep.subr.mxu0 0.0
        %718 = vmatpush2.msra.mxu0 0.0
        %719 = vmatprep.subr.mxu0 0.0
        %720 = vmatpush2.msra.mxu0 0.0
        %721 = vmatprep.mubr.f32.mxu0 0.0
        %722 = vmatmul.mubr.f32.gmra.mxu0 %v649
        %v723 = vpop.f32.mrf.mxu0
        %v724 = vadd.f32 %v644, %v723
        %v725 = vpop.f32.mrf.mxu0
        %v726 = vadd.f32 %v646, %v725
        %727 = vdwg.mxu0
        %728 = vrot.lane.b32.xlu0 %v267, 112
        %v729 = vpop.permute.xlu0 %728
        %730 = vrot.lane.b32.xlu0 %v264, 112
        %v731 = vpop.permute.xlu0 %730
        %732 = vrot.lane.b32.xlu0 %v452, 112
        %v733 = vpop.permute.xlu0 %732
        %vm734 = vcmp.lt.s32.totalorder %v258, 112
        %v735 = vsel %vm734, %v731, %v733
        %v736 = vsel %vm734, %v729, %v731
        %s737 = scalar_lea.vmem %s3, 56
        %v738 = vld [vmem:[%s737] sm:$0xff]
        %v740 = vsel %vm290, %v738, 0
        %v743 = vsel %vm294, %v736, 0
        %v746 = vsel %vm294, %v735, 0
        %748 = vmatprep.subr.mxu0 0.0
        %749 = vmatpush1.msra.mxu0 0.0
        %750 = vmatprep.subr.mxu0 0.0
        %751 = vmatpush1.msra.mxu0 0.0
        %752 = vmatprep.subr.mxu0 0.0
        %753 = vmatpush1.msra.mxu0 0.0
        %754 = vmatprep.subr.mxu0 0.0
        %755 = vmatpush1.msra.mxu0 0.0
        %756 = vmatprep.subr.mxu0 0.0
        %757 = vmatpush1.msra.mxu0 0.0
        %758 = vmatprep.subr.mxu0 0.0
        %759 = vmatpush1.msra.mxu0 0.0
        %760 = vmatprep.subr.mxu0 0.0
        %761 = vmatpush1.msra.mxu0 0.0
        %762 = vmatprep.subr.mxu0 0.0
        %763 = vmatpush1.msra.mxu0 0.0
        %764 = vmatprep.subr.mxu0 0.0
        %765 = vmatpush1.msra.mxu0 0.0
        %766 = vmatprep.subr.mxu0 0.0
        %767 = vmatpush1.msra.mxu0 0.0
        %768 = vmatprep.subr.mxu0 0.0
        %769 = vmatpush1.msra.mxu0 0.0
        %770 = vmatprep.subr.mxu0 0.0
        %771 = vmatpush1.msra.mxu0 0.0
        %772 = vmatprep.subr.mxu0 0.0
        %773 = vmatpush1.msra.mxu0 0.0
        %774 = vmatprep.subr.mxu0 0.0
        %775 = vmatpush1.msra.mxu0 0.0
        %776 = vmatprep.subr.mxu0 0.0
        %777 = vmatpush1.msra.mxu0 0.0
        %778 = vmatprep.subr.mxu0 %v746
        %779 = vmatpush1.msra.mxu0 %v743
        %780 = vmatprep.subr.mxu0 0.0
        %781 = vmatpush2.msra.mxu0 0.0
        %782 = vmatprep.subr.mxu0 0.0
        %783 = vmatpush2.msra.mxu0 0.0
        %784 = vmatprep.subr.mxu0 0.0
        %785 = vmatpush2.msra.mxu0 0.0
        %786 = vmatprep.subr.mxu0 0.0
        %787 = vmatpush2.msra.mxu0 0.0
        %788 = vmatprep.subr.mxu0 0.0
        %789 = vmatpush2.msra.mxu0 0.0
        %790 = vmatprep.subr.mxu0 0.0
        %791 = vmatpush2.msra.mxu0 0.0
        %792 = vmatprep.subr.mxu0 0.0
        %793 = vmatpush2.msra.mxu0 0.0
        %794 = vmatprep.subr.mxu0 0.0
        %795 = vmatpush2.msra.mxu0 0.0
        %796 = vmatprep.subr.mxu0 0.0
        %797 = vmatpush2.msra.mxu0 0.0
        %798 = vmatprep.subr.mxu0 0.0
        %799 = vmatpush2.msra.mxu0 0.0
        %800 = vmatprep.subr.mxu0 0.0
        %801 = vmatpush2.msra.mxu0 0.0
        %802 = vmatprep.subr.mxu0 0.0
        %803 = vmatpush2.msra.mxu0 0.0
        %804 = vmatprep.subr.mxu0 0.0
        %805 = vmatpush2.msra.mxu0 0.0
        %806 = vmatprep.subr.mxu0 0.0
        %807 = vmatpush2.msra.mxu0 0.0
        %808 = vmatprep.subr.mxu0 0.0
        %809 = vmatpush2.msra.mxu0 0.0
        %810 = vmatprep.subr.mxu0 0.0
        %811 = vmatpush2.msra.mxu0 0.0
        %812 = vmatprep.mubr.f32.mxu0 0.0
        %813 = vmatmul.mubr.f32.gmra.mxu0 %v740
        %v814 = vpop.f32.mrf.mxu0
        %v815 = vadd.f32 0.0, %v814
        %v816 = vpop.f32.mrf.mxu0
        %v817 = vadd.f32 0.0, %v816
        %818 = vdwg.mxu0
        %v819 = vadd.f32 %v724, %v815
        %v820 = vadd.f32 %v726, %v817
        %v821 = vadd.f32 %v555, %v819
        %v822 = vadd.f32 %v556, %v820
        %823 = vrot.lane.b32.xlu0 %v263, 15
        %v824 = vpop.permute.xlu0 %823
        %825 = vrot.lane.b32.xlu0 %v267, 15
        %v826 = vpop.permute.xlu0 %825
        %827 = vrot.lane.b32.xlu0 %v264, 15
        %v828 = vpop.permute.xlu0 %827
        %vm829 = vcmp.lt.s32.totalorder %v258, 15
        %v830 = vsel %vm829, %v826, %v828
        %v831 = vsel %vm829, %v824, %v826
        %s832 = scalar_lea.vmem %s3, 16
        %v833 = vld [vmem:[%s832] sm:$0xff]
        %834 = vrot.lane.b32.xlu0 %v267, 127
        %v835 = vpop.permute.xlu0 %834
        %836 = vrot.lane.b32.xlu0 %v264, 127
        %v837 = vpop.permute.xlu0 %836
        %838 = vrot.lane.b32.xlu0 %v452, 127
        %v839 = vpop.permute.xlu0 %838
        %vm840 = vcmp.lt.s32.totalorder %v258, 127
        %v841 = vsel %vm840, %v837, %v839
        %v842 = vsel %vm840, %v835, %v837
        %s843 = scalar_lea.vmem %s3, 40
        %v844 = vld [vmem:[%s843] sm:$0xff]
        %v846 = vsel %vm290, %v844, 0
        %v849 = vsel %vm294, %v842, 0
        %v852 = vsel %vm294, %v841, 0
        %854 = vmatprep.subr.mxu0 0.0
        %855 = vmatpush1.msra.mxu0 0.0
        %856 = vmatprep.subr.mxu0 0.0
        %857 = vmatpush1.msra.mxu0 0.0
        %858 = vmatprep.subr.mxu0 0.0
        %859 = vmatpush1.msra.mxu0 0.0
        %860 = vmatprep.subr.mxu0 0.0
        %861 = vmatpush1.msra.mxu0 0.0
        %862 = vmatprep.subr.mxu0 0.0
        %863 = vmatpush1.msra.mxu0 0.0
        %864 = vmatprep.subr.mxu0 0.0
        %865 = vmatpush1.msra.mxu0 0.0
        %866 = vmatprep.subr.mxu0 0.0
        %867 = vmatpush1.msra.mxu0 0.0
        %868 = vmatprep.subr.mxu0 0.0
        %869 = vmatpush1.msra.mxu0 0.0
        %870 = vmatprep.subr.mxu0 0.0
        %871 = vmatpush1.msra.mxu0 0.0
        %872 = vmatprep.subr.mxu0 0.0
        %873 = vmatpush1.msra.mxu0 0.0
        %874 = vmatprep.subr.mxu0 0.0
        %875 = vmatpush1.msra.mxu0 0.0
        %876 = vmatprep.subr.mxu0 0.0
        %877 = vmatpush1.msra.mxu0 0.0
        %878 = vmatprep.subr.mxu0 0.0
        %879 = vmatpush1.msra.mxu0 0.0
        %880 = vmatprep.subr.mxu0 0.0
        %881 = vmatpush1.msra.mxu0 0.0
        %882 = vmatprep.subr.mxu0 0.0
        %883 = vmatpush1.msra.mxu0 0.0
        %884 = vmatprep.subr.mxu0 %v852
        %885 = vmatpush1.msra.mxu0 %v849
        %886 = vmatprep.subr.mxu0 0.0
        %887 = vmatpush2.msra.mxu0 0.0
        %888 = vmatprep.subr.mxu0 0.0
        %889 = vmatpush2.msra.mxu0 0.0
        %890 = vmatprep.subr.mxu0 0.0
        %891 = vmatpush2.msra.mxu0 0.0
        %892 = vmatprep.subr.mxu0 0.0
        %893 = vmatpush2.msra.mxu0 0.0
        %894 = vmatprep.subr.mxu0 0.0
        %895 = vmatpush2.msra.mxu0 0.0
        %896 = vmatprep.subr.mxu0 0.0
        %897 = vmatpush2.msra.mxu0 0.0
        %898 = vmatprep.subr.mxu0 0.0
        %899 = vmatpush2.msra.mxu0 0.0
        %900 = vmatprep.subr.mxu0 0.0
        %901 = vmatpush2.msra.mxu0 0.0
        %902 = vmatprep.subr.mxu0 0.0
        %903 = vmatpush2.msra.mxu0 0.0
        %904 = vmatprep.subr.mxu0 0.0
        %905 = vmatpush2.msra.mxu0 0.0
        %906 = vmatprep.subr.mxu0 0.0
        %907 = vmatpush2.msra.mxu0 0.0
        %908 = vmatprep.subr.mxu0 0.0
        %909 = vmatpush2.msra.mxu0 0.0
        %910 = vmatprep.subr.mxu0 0.0
        %911 = vmatpush2.msra.mxu0 0.0
        %912 = vmatprep.subr.mxu0 0.0
        %913 = vmatpush2.msra.mxu0 0.0
        %914 = vmatprep.subr.mxu0 0.0
        %915 = vmatpush2.msra.mxu0 0.0
        %916 = vmatprep.subr.mxu0 0.0
        %917 = vmatpush2.msra.mxu0 0.0
        %918 = vmatprep.mubr.f32.mxu0 0.0
        %919 = vmatmul.mubr.f32.gmra.mxu0 %v846
        %v920 = vpop.f32.mrf.mxu0
        %v921 = vadd.f32 0.0, %v920
        %v922 = vpop.f32.mrf.mxu0
        %v923 = vadd.f32 0.0, %v922
        %924 = vdwg.mxu0
        %v926 = vsel %vm290, %v833, 0
        %v929 = vsel %vm294, %v831, 0
        %v932 = vsel %vm294, %v830, 0
        %934 = vmatprep.subr.mxu0 0.0
        %935 = vmatpush1.msra.mxu0 0.0
        %936 = vmatprep.subr.mxu0 0.0
        %937 = vmatpush1.msra.mxu0 0.0
        %938 = vmatprep.subr.mxu0 0.0
        %939 = vmatpush1.msra.mxu0 0.0
        %940 = vmatprep.subr.mxu0 0.0
        %941 = vmatpush1.msra.mxu0 0.0
        %942 = vmatprep.subr.mxu0 0.0
        %943 = vmatpush1.msra.mxu0 0.0
        %944 = vmatprep.subr.mxu0 0.0
        %945 = vmatpush1.msra.mxu0 0.0
        %946 = vmatprep.subr.mxu0 0.0
        %947 = vmatpush1.msra.mxu0 0.0
        %948 = vmatprep.subr.mxu0 0.0
        %949 = vmatpush1.msra.mxu0 0.0
        %950 = vmatprep.subr.mxu0 0.0
        %951 = vmatpush1.msra.mxu0 0.0
        %952 = vmatprep.subr.mxu0 0.0
        %953 = vmatpush1.msra.mxu0 0.0
        %954 = vmatprep.subr.mxu0 0.0
        %955 = vmatpush1.msra.mxu0 0.0
        %956 = vmatprep.subr.mxu0 0.0
        %957 = vmatpush1.msra.mxu0 0.0
        %958 = vmatprep.subr.mxu0 0.0
        %959 = vmatpush1.msra.mxu0 0.0
        %960 = vmatprep.subr.mxu0 0.0
        %961 = vmatpush1.msra.mxu0 0.0
        %962 = vmatprep.subr.mxu0 0.0
        %963 = vmatpush1.msra.mxu0 0.0
        %964 = vmatprep.subr.mxu0 %v932
        %965 = vmatpush1.msra.mxu0 %v929
        %966 = vmatprep.subr.mxu0 0.0
        %967 = vmatpush2.msra.mxu0 0.0
        %968 = vmatprep.subr.mxu0 0.0
        %969 = vmatpush2.msra.mxu0 0.0
        %970 = vmatprep.subr.mxu0 0.0
        %971 = vmatpush2.msra.mxu0 0.0
        %972 = vmatprep.subr.mxu0 0.0
        %973 = vmatpush2.msra.mxu0 0.0
        %974 = vmatprep.subr.mxu0 0.0
        %975 = vmatpush2.msra.mxu0 0.0
        %976 = vmatprep.subr.mxu0 0.0
        %977 = vmatpush2.msra.mxu0 0.0
        %978 = vmatprep.subr.mxu0 0.0
        %979 = vmatpush2.msra.mxu0 0.0
        %980 = vmatprep.subr.mxu0 0.0
        %981 = vmatpush2.msra.mxu0 0.0
        %982 = vmatprep.subr.mxu0 0.0
        %983 = vmatpush2.msra.mxu0 0.0
        %984 = vmatprep.subr.mxu0 0.0
        %985 = vmatpush2.msra.mxu0 0.0
        %986 = vmatprep.subr.mxu0 0.0
        %987 = vmatpush2.msra.mxu0 0.0
        %988 = vmatprep.subr.mxu0 0.0
        %989 = vmatpush2.msra.mxu0 0.0
        %990 = vmatprep.subr.mxu0 0.0
        %991 = vmatpush2.msra.mxu0 0.0
        %992 = vmatprep.subr.mxu0 0.0
        %993 = vmatpush2.msra.mxu0 0.0
        %994 = vmatprep.subr.mxu0 0.0
        %995 = vmatpush2.msra.mxu0 0.0
        %996 = vmatprep.subr.mxu0 0.0
        %997 = vmatpush2.msra.mxu0 0.0
        %998 = vmatprep.mubr.f32.mxu0 0.0
        %999 = vmatmul.mubr.f32.gmra.mxu0 %v926
        %v1000 = vpop.f32.mrf.mxu0
        %v1001 = vadd.f32 %v921, %v1000
        %v1002 = vpop.f32.mrf.mxu0
        %v1003 = vadd.f32 %v923, %v1002
        %1004 = vdwg.mxu0
        %1005 = vrot.lane.b32.xlu0 %v267, 111
        %v1006 = vpop.permute.xlu0 %1005
        %1007 = vrot.lane.b32.xlu0 %v264, 111
        %v1008 = vpop.permute.xlu0 %1007
        %1009 = vrot.lane.b32.xlu0 %v452, 111
        %v1010 = vpop.permute.xlu0 %1009
        %vm1011 = vcmp.lt.s32.totalorder %v258, 111
        %v1012 = vsel %vm1011, %v1008, %v1010
        %v1013 = vsel %vm1011, %v1006, %v1008
        %s1014 = scalar_lea.vmem %s3, 64
        %v1015 = vld [vmem:[%s1014] sm:$0xff]
        %v1017 = vsel %vm290, %v1015, 0
        %v1020 = vsel %vm294, %v1013, 0
        %v1023 = vsel %vm294, %v1012, 0
        %1025 = vmatprep.subr.mxu0 0.0
        %1026 = vmatpush1.msra.mxu0 0.0
        %1027 = vmatprep.subr.mxu0 0.0
        %1028 = vmatpush1.msra.mxu0 0.0
        %1029 = vmatprep.subr.mxu0 0.0
        %1030 = vmatpush1.msra.mxu0 0.0
        %1031 = vmatprep.subr.mxu0 0.0
        %1032 = vmatpush1.msra.mxu0 0.0
        %1033 = vmatprep.subr.mxu0 0.0
        %1034 = vmatpush1.msra.mxu0 0.0
        %1035 = vmatprep.subr.mxu0 0.0
        %1036 = vmatpush1.msra.mxu0 0.0
        %1037 = vmatprep.subr.mxu0 0.0
        %1038 = vmatpush1.msra.mxu0 0.0
        %1039 = vmatprep.subr.mxu0 0.0
        %1040 = vmatpush1.msra.mxu0 0.0
        %1041 = vmatprep.subr.mxu0 0.0
        %1042 = vmatpush1.msra.mxu0 0.0
        %1043 = vmatprep.subr.mxu0 0.0
        %1044 = vmatpush1.msra.mxu0 0.0
        %1045 = vmatprep.subr.mxu0 0.0
        %1046 = vmatpush1.msra.mxu0 0.0
        %1047 = vmatprep.subr.mxu0 0.0
        %1048 = vmatpush1.msra.mxu0 0.0
        %1049 = vmatprep.subr.mxu0 0.0
        %1050 = vmatpush1.msra.mxu0 0.0
        %1051 = vmatprep.subr.mxu0 0.0
        %1052 = vmatpush1.msra.mxu0 0.0
        %1053 = vmatprep.subr.mxu0 0.0
        %1054 = vmatpush1.msra.mxu0 0.0
        %1055 = vmatprep.subr.mxu0 %v1023
        %1056 = vmatpush1.msra.mxu0 %v1020
        %1057 = vmatprep.subr.mxu0 0.0
        %1058 = vmatpush2.msra.mxu0 0.0
        %1059 = vmatprep.subr.mxu0 0.0
        %1060 = vmatpush2.msra.mxu0 0.0
        %1061 = vmatprep.subr.mxu0 0.0
        %1062 = vmatpush2.msra.mxu0 0.0
        %1063 = vmatprep.subr.mxu0 0.0
        %1064 = vmatpush2.msra.mxu0 0.0
        %1065 = vmatprep.subr.mxu0 0.0
        %1066 = vmatpush2.msra.mxu0 0.0
        %1067 = vmatprep.subr.mxu0 0.0
        %1068 = vmatpush2.msra.mxu0 0.0
        %1069 = vmatprep.subr.mxu0 0.0
        %1070 = vmatpush2.msra.mxu0 0.0
        %1071 = vmatprep.subr.mxu0 0.0
        %1072 = vmatpush2.msra.mxu0 0.0
        %1073 = vmatprep.subr.mxu0 0.0
        %1074 = vmatpush2.msra.mxu0 0.0
        %1075 = vmatprep.subr.mxu0 0.0
        %1076 = vmatpush2.msra.mxu0 0.0
        %1077 = vmatprep.subr.mxu0 0.0
        %1078 = vmatpush2.msra.mxu0 0.0
        %1079 = vmatprep.subr.mxu0 0.0
        %1080 = vmatpush2.msra.mxu0 0.0
        %1081 = vmatprep.subr.mxu0 0.0
        %1082 = vmatpush2.msra.mxu0 0.0
        %1083 = vmatprep.subr.mxu0 0.0
        %1084 = vmatpush2.msra.mxu0 0.0
        %1085 = vmatprep.subr.mxu0 0.0
        %1086 = vmatpush2.msra.mxu0 0.0
        %1087 = vmatprep.subr.mxu0 0.0
        %1088 = vmatpush2.msra.mxu0 0.0
        %1089 = vmatprep.mubr.f32.mxu0 0.0
        %1090 = vmatmul.mubr.f32.gmra.mxu0 %v1017
        %v1091 = vpop.f32.mrf.mxu0
        %v1092 = vadd.f32 0.0, %v1091
        %v1093 = vpop.f32.mrf.mxu0
        %v1094 = vadd.f32 0.0, %v1093
        %1095 = vdwg.mxu0
        %v1096 = vadd.f32 %v1001, %v1092
        %v1097 = vadd.f32 %v1003, %v1094
        %vm1098 = vcmp.lt.s32.totalorder %v260, 15
        %vm1099 = vcmp.lt.s32.totalorder %v261, 15
        %v1100 = vsel %vm1098, 1, 0
        %v1101 = vsel %vm1099, 1, 0
        %vm1102 = vcmp.eq.s32.totalorder %v1100, 1
        %vm1103 = vcmp.eq.s32.totalorder %v1101, 1
        %v1104 = vsel %vm1102, %v1096, 0.0
        %v1105 = vsel %vm1103, %v1097, 0.0
        %v1106 = vadd.f32 %v821, %v1104
        %v1107 = vadd.f32 %v822, %v1105
        %1109 = vset.pattern.permute.xlu0 0
        %1110 = vperm.xlu0 %1109, %v262
        %v1111 = vpop.permute.xlu0 %1110
        %v1113 = vadd.f32 %v1106, %v1111
        %v1114 = vadd.f32 %v1107, %v1111
        %v1115 = vld [vmem:[%s252] sm:$0x3]
        %1116 = vset.pattern.permute.xlu0 1
        %1117 = vperm.xlu0 %1116, %v262
        %v1118 = vpop.permute.xlu0 %1117
        %v1121 = vlaneseq
        %v1122 = vshrl.u32 %v1121, 7
        %v1123 = vsub.s32 0, %v1122
        %v1124 = vrot.slane %v1115, %v1123
        %v1125 = vlaneseq
        %v1126 = vshrl.u32 %v1125, 7
        %v1127 = vsub.s32 1, %v1126
        %v1128 = vrot.slane %v1115, %v1127
        %v1131 = vmul.f32 %v1118, %v1124
        %v1132 = vmul.f32 %v1118, %v1128
        %v1133 = vadd.f32 %v1113, %v1131
        %v1134 = vadd.f32 %v1114, %v1132
        %vm1135 = vcmp.gt.f32.partialorder %v1133, 0.0
        %vm1136 = vcmp.gt.f32.partialorder %v1134, 0.0
        %v1137 = vmul.f32 %v1133, 0.2
        %v1138 = vmul.f32 %v1134, 0.2
        %v1139 = vsel %vm1135, %v1133, %v1137
        %v1140 = vsel %vm1136, %v1134, %v1138
        %v1141 = vadd.f32 %v1139, %v1140
        %1142 = vadd.xlane.f32.xlu0 %v1141
        %v1143 = vpop.xlane.xlu0 %1142
        %v1144 = vrcp.pop 256.0
        %v1145 = vmul.f32 %v1143, %v1144
        %v1146 = vsub.f32 %v1139, %v1145
        %v1147 = vsub.f32 %v1140, %v1145
        %v1148 = vmul.f32 %v1146, %v1146
        %v1149 = vmul.f32 %v1147, %v1147
        %v1150 = vadd.f32 %v1148, %v1149
        %1151 = vadd.xlane.f32.xlu0 %v1150
        %v1152 = vpop.xlane.xlu0 %1151
        %v1153 = vmul.f32 %v1152, %v1144
        %v1154 = vadd.f32 %v1153, 1e-05
        %v1155 = vrsqrt.pop %v1154
        %v1156 = vmul.f32 %v1146, %v1155
        %v1157 = vmul.f32 %v1147, %v1155
        %v1158 = vld [vmem:[%s256] sm:$0xff]
        %1160 = vset.pattern.permute.xlu0 0
        %1161 = vperm.xlu0 %1160, %v1158
        %v1162 = vpop.permute.xlu0 %1161
        %v1164 = vmul.f32 %v1162, %v1156
        %v1165 = vmul.f32 %v1162, %v1157
        %1166 = vset.pattern.permute.xlu0 1
        %1167 = vperm.xlu0 %1166, %v1158
        %v1168 = vpop.permute.xlu0 %1167
        %v1170 = vadd.f32 %v1164, %v1168
        %v1171 = vadd.f32 %v1165, %v1168
        %1172 = vst [vmem:[%s243] sm:$0xff] %v1170
        %1173 = vst [vmem:[%s243 + $0x8] sm:$0xff] %v1171
        %s1174 = sand.u32 %s147, 1
        %s1175 = scalar_lea.sflag [#allocation3], %s1174
        %s1176 = sand.u32 %s147, 1
        %s1177 = smul.addr %s1176, 16
        %s1178 = scalar_lea.vmem [#allocation2], %s1177
        // Predicated region
        $region41: #{tpu_custom_call.1} parent=39 // pred_check
          %p1179 = pneg %p157
        $region42: #{tpu_custom_call.1} parent=39 // pred_check_branch
          %1181 = sbr.rel (%p1179) target = $region44
        $region43: #{tpu_custom_call.1} parent=39 // pred_region
          %s1183 = ssub.s32 256, 256
          %1184 = vsyncadd %s1175, %s1183
          %s1185 = smul.addr %s19, 2
          %s1186 = smul.addr %s1185, 128
          %s1187 = scalar_lea.hbm %s5, %s1186
          %s1189 = sshll.u32 %s1178, 4
          %s1190 = int_to_ptr.vmem [resolvable:$true] %s1189
          %1192 = dma.vmem_to_hbm [thread:$0]  %s1190, 256, %s1187, %s1175
        $region44: #{tpu_custom_call.1} parent=39 // pred_fallthru
          _
      $region40: #{tpu_custom_call.1} parent=5 // pred_fallthru
        _
      %p1193 = scmp.le.s32.totalorder 2, %s14
      // Predicated region
      $region45: #{tpu_custom_call.1} parent=5 // pred_check
        %p1194 = pneg %p1193
      $region46: #{tpu_custom_call.1} parent=5 // pred_check_branch
        %1196 = sbr.rel (%p1194) target = $region48
      $region47: #{tpu_custom_call.1} parent=5 // pred_region
        %s1197 = ssub.s32 %s14, 2
        // Predicated region
        $region49: #{tpu_custom_call.1} parent=47 // pred_check
          %p1198 = pneg %p163
        $region50: #{tpu_custom_call.1} parent=47 // pred_check_branch
          %1200 = sbr.rel (%p1198) target = $region52
        $region51: #{tpu_custom_call.1} parent=47 // pred_region
          %s1201 = sand.u32 %s148, 1
          %s1202 = scalar_lea.sflag [#allocation3], %s1201
          %s1203 = sand.u32 %s148, 1
          %s1204 = smul.addr %s1203, 16
          %s1205 = scalar_lea.vmem [#allocation2], %s1204
          %1206 = dma.done %s1202, 256
        $region52: #{tpu_custom_call.1} parent=47 // pred_fallthru
          _
      $region48: #{tpu_custom_call.1} parent=5 // pred_fallthru
        _
    $region6: #{tpu_custom_call.1} parent=1 // loop_footer
      %s18 = sadd.s32 1, %s14
    $region7: #{tpu_custom_call.1} parent=1 // loop_footer_branch
      %13 = sbr.rel target = $region3
    $region8: #{tpu_custom_call.1} parent=1 // loop_exit
      _
    %1207 = vsyncpa [#allocation3], 1
    %s1208 = scalar_lea.sflag [#allocation3], 1
    %1209 = vsyncpa %s1208, 1

</llo_original>
